<compile_context>
chip_gen: v6e
topology: v6e:2x2x1
jax: 0.10.0
libtpu: 0.0.40
codegen_flags: <defaults>
</compile_context>

<pallas_src>
import functools

import jax
import jax.numpy as jnp
from jax.experimental import pallas as pl
from jax.experimental.pallas import tpu as pltpu

EPS = 1e-5

# bf16 MXU operands (f32 accumulation).  Marginal at C=8; enable on v5e/v6e at
# real MDEQ channel counts (loosen the validation tolerance accordingly).
USE_BF16_MXU = False


# --------------------------------------------------------------------------
# Pallas kernel: the whole BranchNet for one sample, channel-major (C, HW)
# --------------------------------------------------------------------------
def _branchnet_kernel(*refs, num_blocks, has_injection, H, W, lpad):
    if has_injection:
        (x_ref, inj_ref, w1_ref, w2_ref, gnw_ref, gnb_ref, avg_ref,
         y_ref, pad_ref) = refs
    else:
        (x_ref, w1_ref, w2_ref, gnw_ref, gnb_ref, avg_ref,
         y_ref, pad_ref) = refs
        inj_ref = None

    C = x_ref.shape[1]
    HW = H * W

    # Zero only the two halo strips (lane-tile aligned, 2 vreg stores).  The
    # interior [lpad, lpad+HW) is fully rewritten before every conv, so the
    # strips stay zero for the rest of the kernel.
    zero_strip = jnp.zeros((C, lpad), jnp.float32)
    pad_ref[:, :lpad] = zero_strip
    pad_ref[:, lpad + HW:] = zero_strip

    # Column-validity masks for the horizontally shifted taps (computed once,
    # reused by every conv of every block).
    col = jax.lax.broadcasted_iota(jnp.int32, (1, HW), 1) % W
    mask_l = col >= 1          # taps reading source column w-1
    mask_r = col <= (W - 2)    # taps reading source column w+1

    avg = avg_ref[...]         # (C, C): group-average aggregation matrix

    def conv3x3(h, w_mat):
        # h: (C, HW) f32; w_mat: (C, 9C).  stride=1, pad=1, no bias.
        # Write the activation into the zero-padded line buffer (aligned
        # store), read the 9 shifted tap windows (lane-offset reads), stack to
        # an im2col patch and do ONE MXU matmul.
        pad_ref[:, lpad:lpad + HW] = h
        taps = []
        for dy in (-1, 0, 1):
            for dx in (-1, 0, 1):
                t = dy * W + dx
                s = pad_ref[:, lpad + t: lpad + t + HW]      # (C, HW)
                if dx == -1:
                    s = jnp.where(mask_l, s, 0.0)
                elif dx == 1:
                    s = jnp.where(mask_r, s, 0.0)
                taps.append(s)
        patch = jnp.concatenate(taps, axis=0)                # (9C, HW)
        if USE_BF16_MXU:
            patch = patch.astype(jnp.bfloat16)
            w_mat = w_mat.astype(jnp.bfloat16)
        return jnp.dot(w_mat, patch, preferred_element_type=jnp.float32)

    def group_norm(h, gamma, beta):
        # h: (C, HW) f32; gamma/beta: (C, 1).  Two-pass per-group statistics.
        mean_c = jnp.dot(avg, jnp.sum(h, axis=1, keepdims=True),
                         preferred_element_type=jnp.float32)     # (C, 1)
        d = h - mean_c
        var_c = jnp.dot(avg, jnp.sum(d * d, axis=1, keepdims=True),
                        preferred_element_type=jnp.float32)      # (C, 1)
        inv = jax.lax.rsqrt(var_c + EPS)
        return d * (inv * gamma) + beta

    h = x_ref[0].astype(jnp.float32)                             # (C, HW)
    for blk in range(num_blocks):
        # conv1 -> gn1 -> relu
        out = conv3x3(h, w1_ref[blk])
        out = group_norm(out, gnw_ref[blk, 0], gnb_ref[blk, 0])
        out = jnp.maximum(out, 0.0)
        # conv2 (+ injection, block 0 only) -> gn2
        out = conv3x3(out, w2_ref[blk])
        if blk == 0 and inj_ref is not None:
            out = out + inj_ref[0].astype(jnp.float32)
        out = group_norm(out, gnw_ref[blk, 1], gnb_ref[blk, 1])
        # + residual -> relu -> gn3
        out = jnp.maximum(out + h, 0.0)
        h = group_norm(out, gnw_ref[blk, 2], gnb_ref[blk, 2])

    y_ref[0] = h.astype(y_ref.dtype)                             # lane-dense store


# --------------------------------------------------------------------------
# BranchNet wrapper (NCHW in/out, matching the PyTorch module)
# --------------------------------------------------------------------------
def branch_net_forward(x_nchw, block_params, injection=None, v=None):
    # v is the Meta-Learning context vector; unused in the default path (None).
    B, C, H, W = x_nchw.shape
    HW = H * W
    NB = len(block_params)
    G = block_params[0]["G"]
    cpg = C // G

    # Pack per-block parameters once (tiny host-side work).
    w1_all = jnp.stack([p["w1_mat"] for p in block_params])          # (NB, C, 9C)
    w2_all = jnp.stack([p["w2_mat"] for p in block_params])          # (NB, C, 9C)
    gnw_all = jnp.stack([jnp.stack([p["g1w"], p["g2w"], p["g3w"]])
                         for p in block_params])[..., None]          # (NB, 3, C, 1)
    gnb_all = jnp.stack([jnp.stack([p["g1b"], p["g2b"], p["g3b"]])
                         for p in block_params])[..., None]          # (NB, 3, C, 1)
    gmat = block_params[0]["gmat"]                                   # (C, G)
    avg_mat = (gmat @ gmat.T) / float(cpg * HW)                      # (C, C)

    # NCHW flattened over (H, W) is already channel-major: pure reshape.
    x = x_nchw.reshape(B, C, HW)
    has_inj = injection is not None

    LPAD = 128
    assert W + 1 <= LPAD, "pad strip must cover one row of halo"
    pad_width = LPAD + HW + LPAD

    spec_img = pl.BlockSpec((1, C, HW), lambda b: (b, 0, 0))
    spec_w = pl.BlockSpec((NB, C, 9 * C), lambda b: (0, 0, 0))
    spec_gn = pl.BlockSpec((NB, 3, C, 1), lambda b: (0, 0, 0, 0))
    spec_avg = pl.BlockSpec((C, C), lambda b: (0, 0))

    inputs = [x]
    in_specs = [spec_img]
    if has_inj:
        inputs.append(injection.reshape(B, C, HW))
        in_specs.append(spec_img)
    inputs += [w1_all, w2_all, gnw_all, gnb_all, avg_mat]
    in_specs += [spec_w, spec_w, spec_gn, spec_gn, spec_avg]

    kern = functools.partial(_branchnet_kernel, num_blocks=NB,
                             has_injection=has_inj, H=H, W=W, lpad=LPAD)

    y = pl.pallas_call(
        kern,
        out_shape=jax.ShapeDtypeStruct((B, C, HW), x_nchw.dtype),
        grid_spec=pltpu.PrefetchScalarGridSpec(
            num_scalar_prefetch=0,
            grid=(B,),                        # batch axis stays parallel (v7x 2 TCs)
            in_specs=in_specs,
            out_specs=spec_img,
            scratch_shapes=[pltpu.VMEM((C, pad_width), jnp.float32)]),
        compiler_params=pltpu.CompilerParams(
            dimension_semantics=("parallel",)),
    )(*inputs)
    return y.reshape(B, C, H, W)


# --------------------------------------------------------------------------
# Parameter init (deterministic) + pure-JAX reference for verification
# --------------------------------------------------------------------------
def make_block_params(key, C, G):
    cpg = C // G
    k1, k2, k3, k4, k5, k6, k7, k8 = jax.random.split(key, 8)
    # PyTorch conv weight layout OIHW, no bias.
    w1_oihw = 0.1 * jax.random.normal(k1, (C, C, 3, 3), jnp.float32)
    w2_oihw = 0.1 * jax.random.normal(k2, (C, C, 3, 3), jnp.float32)
    gmat = (jnp.arange(C)[:, None] // cpg ==
            jnp.arange(G)[None, :]).astype(jnp.float32)
    # im2col weight: w_mat[o, (dy*3+dx)*C + i] = w_oihw[o, i, dy, dx]
    return {
        "G": G,
        "w1_oihw": w1_oihw,
        "w2_oihw": w2_oihw,
        "w1_mat": jnp.transpose(w1_oihw, (0, 2, 3, 1)).reshape(C, 9 * C),
        "w2_mat": jnp.transpose(w2_oihw, (0, 2, 3, 1)).reshape(C, 9 * C),
        "gmat": gmat,                                  # (C, G)
        "g1w": 1.0 + 0.1 * jax.random.normal(k3, (C,), jnp.float32),
        "g1b": 0.1 * jax.random.normal(k4, (C,), jnp.float32),
        "g2w": 1.0 + 0.1 * jax.random.normal(k5, (C,), jnp.float32),
        "g2b": 0.1 * jax.random.normal(k6, (C,), jnp.float32),
        "g3w": 1.0 + 0.1 * jax.random.normal(k7, (C,), jnp.float32),
        "g3b": 0.1 * jax.random.normal(k8, (C,), jnp.float32),
    }


def _ref_conv(x_nchw, w_oihw):
    return jax.lax.conv_general_dilated(
        x_nchw, w_oihw, window_strides=(1, 1), padding="SAME",
        dimension_numbers=("NCHW", "OIHW", "NCHW"))


def _ref_gn(x, gamma, beta, G):
    N, C, H, W = x.shape
    xg = x.reshape(N, G, C // G, H, W)
    mean = xg.mean(axis=(2, 3, 4), keepdims=True)
    var = ((xg - mean) ** 2).mean(axis=(2, 3, 4), keepdims=True)
    xn = ((xg - mean) / jnp.sqrt(var + EPS)).reshape(N, C, H, W)
    return xn * gamma.reshape(1, C, 1, 1) + beta.reshape(1, C, 1, 1)


def _ref_block(x, inj, p, G):
    out = _ref_conv(x, p["w1_oihw"])
    out = _ref_gn(out, p["g1w"], p["g1b"], G)
    out = jnp.maximum(out, 0.0)
    out = _ref_conv(out, p["w2_oihw"]) + inj
    out = _ref_gn(out, p["g2w"], p["g2b"], G)
    out = out + x
    out = jnp.maximum(out, 0.0)
    return _ref_gn(out, p["g3w"], p["g3b"], G)


def branch_net_reference(x, block_params, injection, G):
    y = _ref_block(x, injection, block_params[0], G)
    for i in range(1, len(block_params)):
        y = _ref_block(y, jnp.zeros_like(y), block_params[i], G)
    return y


# --------------------------------------------------------------------------
if __name__ == "__main__":
    B, C, H, W = 2, 8, 16, 16
    G = 4          # GroupNorm groups (MDEQ NUM_GROUPS)
    NUM_BLOCKS = 2

    key = jax.random.PRNGKey(0)
    kx, ki, kp = jax.random.split(key, 3)
    x = jax.random.normal(kx, (B, C, H, W), jnp.float32)
    injection = jax.random.normal(ki, (B, C, H, W), jnp.float32)

    pkeys = jax.random.split(kp, NUM_BLOCKS)
    block_params = [make_block_params(pkeys[i], C, G) for i in range(NUM_BLOCKS)]

    # With injection (block 0 adds it).
    y = branch_net_forward(x, block_params, injection)
    y = jax.block_until_ready(y)
    y_ref = branch_net_reference(x, block_params, injection, G)
    assert y.shape == (B, C, H, W)
    assert jnp.allclose(y, y_ref, rtol=1e-3, atol=1e-3), (
        float(jnp.max(jnp.abs(y - y_ref))))

    # Without injection (no zero-injection array is ever built or DMA'd).
    y0 = branch_net_forward(x, block_params, None)
    y0 = jax.block_until_ready(y0)
    y0_ref = branch_net_reference(x, block_params, jnp.zeros_like(x), G)
    assert jnp.allclose(y0, y0_ref, rtol=1e-3, atol=1e-3), (
        float(jnp.max(jnp.abs(y0 - y0_ref))))

    print("KERNEL_OK")
</pallas_src>

<mosaic_0001>
module attributes {stable_mosaic.version = 11 : i64} {
  func.func @_branchnet_kernel(%arg0: i32, %arg1: memref<1x8x256xf32, #tpu.memory_space<vmem>>, %arg2: memref<1x8x256xf32, #tpu.memory_space<vmem>>, %arg3: memref<2x8x72xf32, #tpu.memory_space<vmem>>, %arg4: memref<2x8x72xf32, #tpu.memory_space<vmem>>, %arg5: memref<2x3x8x1xf32, #tpu.memory_space<vmem>>, %arg6: memref<2x3x8x1xf32, #tpu.memory_space<vmem>>, %arg7: memref<8x8xf32, #tpu.memory_space<vmem>>, %arg8: memref<1x8x256xf32, #tpu.memory_space<vmem>>, %arg9: memref<8x512xf32, #tpu.memory_space<vmem>>) attributes {dimension_semantics = [#tpu.dimension_semantics<parallel>], iteration_bounds = array<i64: 2>, scalar_prefetch = 0 : i64, scratch_operands = 1 : i64, tpu.core_type = #tpu.core_type<tc>, window_params = [{transform_indices = @transform_0, window_bounds = array<i64: 1, 8, 256>}, {transform_indices = @transform_1, window_bounds = array<i64: 1, 8, 256>}, {pipeline_mode = #tpu.pipeline_mode<synchronous>, transform_indices = @transform_2, window_bounds = array<i64: 2, 8, 72>}, {pipeline_mode = #tpu.pipeline_mode<synchronous>, transform_indices = @transform_3, window_bounds = array<i64: 2, 8, 72>}, {pipeline_mode = #tpu.pipeline_mode<synchronous>, transform_indices = @transform_4, window_bounds = array<i64: 2, 3, 8, 1>}, {pipeline_mode = #tpu.pipeline_mode<synchronous>, transform_indices = @transform_5, window_bounds = array<i64: 2, 3, 8, 1>}, {pipeline_mode = #tpu.pipeline_mode<synchronous>, transform_indices = @transform_6, window_bounds = array<i64: 8, 8>}, {transform_indices = @transform_7, window_bounds = array<i64: 1, 8, 256>}]} {
    %cst = arith.constant 0.000000e+00 : f32
    %0 = vector.broadcast %cst : f32 to vector<8x128xf32>
    %c0 = arith.constant 0 : index
    %c0_0 = arith.constant 0 : index
    %1 = vector.load %arg9[%c0, %c0_0] : memref<8x512xf32, #tpu.memory_space<vmem>>, vector<8x128xf32>
    tpu.vector_store %arg9[%c0, %c0_0], %0 {strides = array<i32>} : memref<8x512xf32, #tpu.memory_space<vmem>>, vector<8x128xf32>,
    %c0_1 = arith.constant 0 : index
    %c384 = arith.constant 384 : index
    %2 = vector.load %arg9[%c0_1, %c384] : memref<8x512xf32, #tpu.memory_space<vmem>>, vector<8x128xf32>
    tpu.vector_store %arg9[%c0_1, %c384], %0 {strides = array<i32>} : memref<8x512xf32, #tpu.memory_space<vmem>>, vector<8x128xf32>,
    %3 = tpu.iota {dimensions = array<i32: 1>} : vector<1x256xi32>
    %c16_i32 = arith.constant 16 : i32
    %c0_i32 = arith.constant 0 : i32
    %4 = arith.cmpi eq, %c16_i32, %c0_i32 : i32
    %c1_i32 = arith.constant 1 : i32
    %5 = arith.select %4, %c1_i32, %c16_i32 : i32
    %6 = vector.broadcast %5 : i32 to vector<1x256xi32>
    %7 = arith.remsi %3, %6 : vector<1x256xi32>
    %c0_i32_2 = arith.constant 0 : i32
    %8 = vector.broadcast %c0_i32_2 : i32 to vector<1x256xi32>
    %9 = arith.cmpi ne, %7, %8 : vector<1x256xi32>
    %c0_i32_3 = arith.constant 0 : i32
    %10 = vector.broadcast %c0_i32_3 : i32 to vector<1x256xi32>
    %11 = arith.cmpi slt, %7, %10 : vector<1x256xi32>
    %c0_i32_4 = arith.constant 0 : i32
    %12 = arith.cmpi slt, %5, %c0_i32_4 : i32
    %13 = vector.broadcast %12 : i1 to vector<1x256xi1>
    %14 = vector.broadcast %13 : vector<1x256xi1> to vector<1x256xi1>
    %15 = arith.xori %11, %14 : vector<1x256xi1>
    %16 = arith.andi %15, %9 : vector<1x256xi1>
    %17 = vector.broadcast %5 : i32 to vector<1x256xi32>
    %18 = arith.addi %7, %17 : vector<1x256xi32>
    %19 = arith.select %16, %18, %7 : vector<1x256xi1>, vector<1x256xi32>
    %c1_i32_5 = arith.constant 1 : i32
    %20 = vector.broadcast %c1_i32_5 : i32 to vector<1x256xi32>
    %21 = arith.cmpi sge, %19, %20 : vector<1x256xi32>
    %c14_i32 = arith.constant 14 : i32
    %22 = vector.broadcast %c14_i32 : i32 to vector<1x256xi32>
    %23 = arith.cmpi sle, %19, %22 : vector<1x256xi32>
    %c0_6 = arith.constant 0 : index
    %c0_7 = arith.constant 0 : index
    %24 = vector.load %arg7[%c0_6, %c0_7] : memref<8x8xf32, #tpu.memory_space<vmem>>, vector<8x8xf32>
    %c0_8 = arith.constant 0 : index
    %c0_9 = arith.constant 0 : index
    %c0_10 = arith.constant 0 : index
    %25 = vector.load %arg1[%c0_8, %c0_9, %c0_10] : memref<1x8x256xf32, #tpu.memory_space<vmem>>, vector<1x8x256xf32>
    %26 = vector.shape_cast %25 : vector<1x8x256xf32> to vector<8x256xf32>
    %c0_11 = arith.constant 0 : index
    %c0_12 = arith.constant 0 : index
    %c0_13 = arith.constant 0 : index
    %27 = vector.load %arg3[%c0_11, %c0_12, %c0_13] : memref<2x8x72xf32, #tpu.memory_space<vmem>>, vector<1x8x72xf32>
    %28 = vector.shape_cast %27 : vector<1x8x72xf32> to vector<8x72xf32>
    %c0_14 = arith.constant 0 : index
    %c128 = arith.constant 128 : index
    %29 = vector.load %arg9[%c0_14, %c128] : memref<8x512xf32, #tpu.memory_space<vmem>>, vector<8x256xf32>
    tpu.vector_store %arg9[%c0_14, %c128], %26 {strides = array<i32>} : memref<8x512xf32, #tpu.memory_space<vmem>>, vector<8x256xf32>,
    %c0_15 = arith.constant 0 : index
    %c111 = arith.constant 111 : index
    %30 = vector.load %arg9[%c0_15, %c111] : memref<8x512xf32, #tpu.memory_space<vmem>>, vector<8x256xf32>
    %cst_16 = arith.constant 0.000000e+00 : f32
    %31 = vector.shape_cast %21 : vector<1x256xi1> to vector<1x256xi1>
    %32 = vector.broadcast %31 : vector<1x256xi1> to vector<8x256xi1>
    %33 = vector.broadcast %cst_16 : f32 to vector<8x256xf32>
    %34 = arith.select %32, %30, %33 : vector<8x256xi1>, vector<8x256xf32>
    %c0_17 = arith.constant 0 : index
    %c112 = arith.constant 112 : index
    %35 = vector.load %arg9[%c0_17, %c112] : memref<8x512xf32, #tpu.memory_space<vmem>>, vector<8x256xf32>
    %c0_18 = arith.constant 0 : index
    %c113 = arith.constant 113 : index
    %36 = vector.load %arg9[%c0_18, %c113] : memref<8x512xf32, #tpu.memory_space<vmem>>, vector<8x256xf32>
    %cst_19 = arith.constant 0.000000e+00 : f32
    %37 = vector.shape_cast %23 : vector<1x256xi1> to vector<1x256xi1>
    %38 = vector.broadcast %37 : vector<1x256xi1> to vector<8x256xi1>
    %39 = vector.broadcast %cst_19 : f32 to vector<8x256xf32>
    %40 = arith.select %38, %36, %39 : vector<8x256xi1>, vector<8x256xf32>
    %c0_20 = arith.constant 0 : index
    %c127 = arith.constant 127 : index
    %41 = vector.load %arg9[%c0_20, %c127] : memref<8x512xf32, #tpu.memory_space<vmem>>, vector<8x256xf32>
    %cst_21 = arith.constant 0.000000e+00 : f32
    %42 = vector.shape_cast %21 : vector<1x256xi1> to vector<1x256xi1>
    %43 = vector.broadcast %42 : vector<1x256xi1> to vector<8x256xi1>
    %44 = vector.broadcast %cst_21 : f32 to vector<8x256xf32>
    %45 = arith.select %43, %41, %44 : vector<8x256xi1>, vector<8x256xf32>
    %c0_22 = arith.constant 0 : index
    %c128_23 = arith.constant 128 : index
    %46 = vector.load %arg9[%c0_22, %c128_23] : memref<8x512xf32, #tpu.memory_space<vmem>>, vector<8x256xf32>
    %c0_24 = arith.constant 0 : index
    %c129 = arith.constant 129 : index
    %47 = vector.load %arg9[%c0_24, %c129] : memref<8x512xf32, #tpu.memory_space<vmem>>, vector<8x256xf32>
    %cst_25 = arith.constant 0.000000e+00 : f32
    %48 = vector.shape_cast %23 : vector<1x256xi1> to vector<1x256xi1>
    %49 = vector.broadcast %48 : vector<1x256xi1> to vector<8x256xi1>
    %50 = vector.broadcast %cst_25 : f32 to vector<8x256xf32>
    %51 = arith.select %49, %47, %50 : vector<8x256xi1>, vector<8x256xf32>
    %c0_26 = arith.constant 0 : index
    %c143 = arith.constant 143 : index
    %52 = vector.load %arg9[%c0_26, %c143] : memref<8x512xf32, #tpu.memory_space<vmem>>, vector<8x256xf32>
    %cst_27 = arith.constant 0.000000e+00 : f32
    %53 = vector.shape_cast %21 : vector<1x256xi1> to vector<1x256xi1>
    %54 = vector.broadcast %53 : vector<1x256xi1> to vector<8x256xi1>
    %55 = vector.broadcast %cst_27 : f32 to vector<8x256xf32>
    %56 = arith.select %54, %52, %55 : vector<8x256xi1>, vector<8x256xf32>
    %c0_28 = arith.constant 0 : index
    %c144 = arith.constant 144 : index
    %57 = vector.load %arg9[%c0_28, %c144] : memref<8x512xf32, #tpu.memory_space<vmem>>, vector<8x256xf32>
    %c0_29 = arith.constant 0 : index
    %c145 = arith.constant 145 : index
    %58 = vector.load %arg9[%c0_29, %c145] : memref<8x512xf32, #tpu.memory_space<vmem>>, vector<8x256xf32>
    %cst_30 = arith.constant 0.000000e+00 : f32
    %59 = vector.shape_cast %23 : vector<1x256xi1> to vector<1x256xi1>
    %60 = vector.broadcast %59 : vector<1x256xi1> to vector<8x256xi1>
    %61 = vector.broadcast %cst_30 : f32 to vector<8x256xf32>
    %62 = arith.select %60, %58, %61 : vector<8x256xi1>, vector<8x256xf32>
    %63 = tpu.concatenate %34, %35, %40, %45, %46, %51, %56, %57, %62 in 0 : vector<8x256xf32>, vector<8x256xf32>, vector<8x256xf32>, vector<8x256xf32>, vector<8x256xf32>, vector<8x256xf32>, vector<8x256xf32>, vector<8x256xf32>, vector<8x256xf32> -> vector<72x256xf32>
    %cst_31 = arith.constant dense<0.000000e+00> : vector<8x256xf32>
    %64 = tpu.matmul %28, %63, %cst_31 {dimension_numbers = #tpu.dot_dimension_numbers<[1], [0], [0], [1], [0, 0, 1, 1], [], []>} : vector<8x72xf32>, vector<72x256xf32>, vector<8x256xf32> -> vector<8x256xf32>
    %c0_32 = arith.constant 0 : index
    %c0_33 = arith.constant 0 : index
    %c0_34 = arith.constant 0 : index
    %c0_35 = arith.constant 0 : index
    %65 = vector.load %arg5[%c0_32, %c0_33, %c0_34, %c0_35] : memref<2x3x8x1xf32, #tpu.memory_space<vmem>>, vector<1x1x8x1xf32>
    %66 = vector.shape_cast %65 : vector<1x1x8x1xf32> to vector<8x1xf32>
    %c0_36 = arith.constant 0 : index
    %c0_37 = arith.constant 0 : index
    %c0_38 = arith.constant 0 : index
    %c0_39 = arith.constant 0 : index
    %67 = vector.load %arg6[%c0_36, %c0_37, %c0_38, %c0_39] : memref<2x3x8x1xf32, #tpu.memory_space<vmem>>, vector<1x1x8x1xf32>
    %68 = vector.shape_cast %67 : vector<1x1x8x1xf32> to vector<8x1xf32>
    %cst_40 = arith.constant dense<0.000000e+00> : vector<8xf32>
    %69 = vector.multi_reduction <add>, %64, %cst_40 [1] : vector<8x256xf32> to vector<8xf32>
    %70 = vector.shape_cast %69 : vector<8xf32> to vector<8x1xf32>
    %cst_41 = arith.constant dense<0.000000e+00> : vector<8x1xf32>
    %71 = tpu.matmul %24, %70, %cst_41 {dimension_numbers = #tpu.dot_dimension_numbers<[1], [0], [0], [1], [0, 0, 1, 1], [], []>} : vector<8x8xf32>, vector<8x1xf32>, vector<8x1xf32> -> vector<8x1xf32>
    %72 = vector.broadcast %71 : vector<8x1xf32> to vector<8x256xf32>
    %73 = arith.subf %64, %72 : vector<8x256xf32>
    %74 = arith.mulf %73, %73 : vector<8x256xf32>
    %cst_42 = arith.constant dense<0.000000e+00> : vector<8xf32>
    %75 = vector.multi_reduction <add>, %74, %cst_42 [1] : vector<8x256xf32> to vector<8xf32>
    %76 = vector.shape_cast %75 : vector<8xf32> to vector<8x1xf32>
    %cst_43 = arith.constant dense<0.000000e+00> : vector<8x1xf32>
    %77 = tpu.matmul %24, %76, %cst_43 {dimension_numbers = #tpu.dot_dimension_numbers<[1], [0], [0], [1], [0, 0, 1, 1], [], []>} : vector<8x8xf32>, vector<8x1xf32>, vector<8x1xf32> -> vector<8x1xf32>
    %cst_44 = arith.constant 9.99999974E-6 : f32
    %78 = vector.broadcast %cst_44 : f32 to vector<8x1xf32>
    %79 = arith.addf %77, %78 : vector<8x1xf32>
    %80 = math.rsqrt %79 : vector<8x1xf32>
    %81 = arith.mulf %80, %66 : vector<8x1xf32>
    %82 = vector.broadcast %81 : vector<8x1xf32> to vector<8x256xf32>
    %83 = arith.mulf %73, %82 : vector<8x256xf32>
    %84 = vector.broadcast %68 : vector<8x1xf32> to vector<8x256xf32>
    %85 = arith.addf %83, %84 : vector<8x256xf32>
    %cst_45 = arith.constant 0.000000e+00 : f32
    %86 = vector.broadcast %cst_45 : f32 to vector<8x256xf32>
    %87 = arith.maximumf %85, %86 : vector<8x256xf32>
    %c0_46 = arith.constant 0 : index
    %c0_47 = arith.constant 0 : index
    %c0_48 = arith.constant 0 : index
    %88 = vector.load %arg4[%c0_46, %c0_47, %c0_48] : memref<2x8x72xf32, #tpu.memory_space<vmem>>, vector<1x8x72xf32>
    %89 = vector.shape_cast %88 : vector<1x8x72xf32> to vector<8x72xf32>
    %c0_49 = arith.constant 0 : index
    %c128_50 = arith.constant 128 : index
    %90 = vector.load %arg9[%c0_49, %c128_50] : memref<8x512xf32, #tpu.memory_space<vmem>>, vector<8x256xf32>
    tpu.vector_store %arg9[%c0_49, %c128_50], %87 {strides = array<i32>} : memref<8x512xf32, #tpu.memory_space<vmem>>, vector<8x256xf32>,
    %c0_51 = arith.constant 0 : index
    %c111_52 = arith.constant 111 : index
    %91 = vector.load %arg9[%c0_51, %c111_52] : memref<8x512xf32, #tpu.memory_space<vmem>>, vector<8x256xf32>
    %cst_53 = arith.constant 0.000000e+00 : f32
    %92 = vector.shape_cast %21 : vector<1x256xi1> to vector<1x256xi1>
    %93 = vector.broadcast %92 : vector<1x256xi1> to vector<8x256xi1>
    %94 = vector.broadcast %cst_53 : f32 to vector<8x256xf32>
    %95 = arith.select %93, %91, %94 : vector<8x256xi1>, vector<8x256xf32>
    %c0_54 = arith.constant 0 : index
    %c112_55 = arith.constant 112 : index
    %96 = vector.load %arg9[%c0_54, %c112_55] : memref<8x512xf32, #tpu.memory_space<vmem>>, vector<8x256xf32>
    %c0_56 = arith.constant 0 : index
    %c113_57 = arith.constant 113 : index
    %97 = vector.load %arg9[%c0_56, %c113_57] : memref<8x512xf32, #tpu.memory_space<vmem>>, vector<8x256xf32>
    %cst_58 = arith.constant 0.000000e+00 : f32
    %98 = vector.shape_cast %23 : vector<1x256xi1> to vector<1x256xi1>
    %99 = vector.broadcast %98 : vector<1x256xi1> to vector<8x256xi1>
    %100 = vector.broadcast %cst_58 : f32 to vector<8x256xf32>
    %101 = arith.select %99, %97, %100 : vector<8x256xi1>, vector<8x256xf32>
    %c0_59 = arith.constant 0 : index
    %c127_60 = arith.constant 127 : index
    %102 = vector.load %arg9[%c0_59, %c127_60] : memref<8x512xf32, #tpu.memory_space<vmem>>, vector<8x256xf32>
    %cst_61 = arith.constant 0.000000e+00 : f32
    %103 = vector.shape_cast %21 : vector<1x256xi1> to vector<1x256xi1>
    %104 = vector.broadcast %103 : vector<1x256xi1> to vector<8x256xi1>
    %105 = vector.broadcast %cst_61 : f32 to vector<8x256xf32>
    %106 = arith.select %104, %102, %105 : vector<8x256xi1>, vector<8x256xf32>
    %c0_62 = arith.constant 0 : index
    %c128_63 = arith.constant 128 : index
    %107 = vector.load %arg9[%c0_62, %c128_63] : memref<8x512xf32, #tpu.memory_space<vmem>>, vector<8x256xf32>
    %c0_64 = arith.constant 0 : index
    %c129_65 = arith.constant 129 : index
    %108 = vector.load %arg9[%c0_64, %c129_65] : memref<8x512xf32, #tpu.memory_space<vmem>>, vector<8x256xf32>
    %cst_66 = arith.constant 0.000000e+00 : f32
    %109 = vector.shape_cast %23 : vector<1x256xi1> to vector<1x256xi1>
    %110 = vector.broadcast %109 : vector<1x256xi1> to vector<8x256xi1>
    %111 = vector.broadcast %cst_66 : f32 to vector<8x256xf32>
    %112 = arith.select %110, %108, %111 : vector<8x256xi1>, vector<8x256xf32>
    %c0_67 = arith.constant 0 : index
    %c143_68 = arith.constant 143 : index
    %113 = vector.load %arg9[%c0_67, %c143_68] : memref<8x512xf32, #tpu.memory_space<vmem>>, vector<8x256xf32>
    %cst_69 = arith.constant 0.000000e+00 : f32
    %114 = vector.shape_cast %21 : vector<1x256xi1> to vector<1x256xi1>
    %115 = vector.broadcast %114 : vector<1x256xi1> to vector<8x256xi1>
    %116 = vector.broadcast %cst_69 : f32 to vector<8x256xf32>
    %117 = arith.select %115, %113, %116 : vector<8x256xi1>, vector<8x256xf32>
    %c0_70 = arith.constant 0 : index
    %c144_71 = arith.constant 144 : index
    %118 = vector.load %arg9[%c0_70, %c144_71] : memref<8x512xf32, #tpu.memory_space<vmem>>, vector<8x256xf32>
    %c0_72 = arith.constant 0 : index
    %c145_73 = arith.constant 145 : index
    %119 = vector.load %arg9[%c0_72, %c145_73] : memref<8x512xf32, #tpu.memory_space<vmem>>, vector<8x256xf32>
    %cst_74 = arith.constant 0.000000e+00 : f32
    %120 = vector.shape_cast %23 : vector<1x256xi1> to vector<1x256xi1>
    %121 = vector.broadcast %120 : vector<1x256xi1> to vector<8x256xi1>
    %122 = vector.broadcast %cst_74 : f32 to vector<8x256xf32>
    %123 = arith.select %121, %119, %122 : vector<8x256xi1>, vector<8x256xf32>
    %124 = tpu.concatenate %95, %96, %101, %106, %107, %112, %117, %118, %123 in 0 : vector<8x256xf32>, vector<8x256xf32>, vector<8x256xf32>, vector<8x256xf32>, vector<8x256xf32>, vector<8x256xf32>, vector<8x256xf32>, vector<8x256xf32>, vector<8x256xf32> -> vector<72x256xf32>
    %cst_75 = arith.constant dense<0.000000e+00> : vector<8x256xf32>
    %125 = tpu.matmul %89, %124, %cst_75 {dimension_numbers = #tpu.dot_dimension_numbers<[1], [0], [0], [1], [0, 0, 1, 1], [], []>} : vector<8x72xf32>, vector<72x256xf32>, vector<8x256xf32> -> vector<8x256xf32>
    %c0_76 = arith.constant 0 : index
    %c0_77 = arith.constant 0 : index
    %c0_78 = arith.constant 0 : index
    %126 = vector.load %arg2[%c0_76, %c0_77, %c0_78] : memref<1x8x256xf32, #tpu.memory_space<vmem>>, vector<1x8x256xf32>
    %127 = vector.shape_cast %126 : vector<1x8x256xf32> to vector<8x256xf32>
    %128 = arith.addf %125, %127 : vector<8x256xf32>
    %c0_79 = arith.constant 0 : index
    %c1 = arith.constant 1 : index
    %c0_80 = arith.constant 0 : index
    %c0_81 = arith.constant 0 : index
    %129 = vector.load %arg5[%c0_79, %c1, %c0_80, %c0_81] : memref<2x3x8x1xf32, #tpu.memory_space<vmem>>, vector<1x1x8x1xf32>
    %130 = vector.shape_cast %129 : vector<1x1x8x1xf32> to vector<8x1xf32>
    %c0_82 = arith.constant 0 : index
    %c1_83 = arith.constant 1 : index
    %c0_84 = arith.constant 0 : index
    %c0_85 = arith.constant 0 : index
    %131 = vector.load %arg6[%c0_82, %c1_83, %c0_84, %c0_85] : memref<2x3x8x1xf32, #tpu.memory_space<vmem>>, vector<1x1x8x1xf32>
    %132 = vector.shape_cast %131 : vector<1x1x8x1xf32> to vector<8x1xf32>
    %cst_86 = arith.constant dense<0.000000e+00> : vector<8xf32>
    %133 = vector.multi_reduction <add>, %128, %cst_86 [1] : vector<8x256xf32> to vector<8xf32>
    %134 = vector.shape_cast %133 : vector<8xf32> to vector<8x1xf32>
    %cst_87 = arith.constant dense<0.000000e+00> : vector<8x1xf32>
    %135 = tpu.matmul %24, %134, %cst_87 {dimension_numbers = #tpu.dot_dimension_numbers<[1], [0], [0], [1], [0, 0, 1, 1], [], []>} : vector<8x8xf32>, vector<8x1xf32>, vector<8x1xf32> -> vector<8x1xf32>
    %136 = vector.broadcast %135 : vector<8x1xf32> to vector<8x256xf32>
    %137 = arith.subf %128, %136 : vector<8x256xf32>
    %138 = arith.mulf %137, %137 : vector<8x256xf32>
    %cst_88 = arith.constant dense<0.000000e+00> : vector<8xf32>
    %139 = vector.multi_reduction <add>, %138, %cst_88 [1] : vector<8x256xf32> to vector<8xf32>
    %140 = vector.shape_cast %139 : vector<8xf32> to vector<8x1xf32>
    %cst_89 = arith.constant dense<0.000000e+00> : vector<8x1xf32>
    %141 = tpu.matmul %24, %140, %cst_89 {dimension_numbers = #tpu.dot_dimension_numbers<[1], [0], [0], [1], [0, 0, 1, 1], [], []>} : vector<8x8xf32>, vector<8x1xf32>, vector<8x1xf32> -> vector<8x1xf32>
    %cst_90 = arith.constant 9.99999974E-6 : f32
    %142 = vector.broadcast %cst_90 : f32 to vector<8x1xf32>
    %143 = arith.addf %141, %142 : vector<8x1xf32>
    %144 = math.rsqrt %143 : vector<8x1xf32>
    %145 = arith.mulf %144, %130 : vector<8x1xf32>
    %146 = vector.broadcast %145 : vector<8x1xf32> to vector<8x256xf32>
    %147 = arith.mulf %137, %146 : vector<8x256xf32>
    %148 = vector.broadcast %132 : vector<8x1xf32> to vector<8x256xf32>
    %149 = arith.addf %147, %148 : vector<8x256xf32>
    %150 = arith.addf %149, %26 : vector<8x256xf32>
    %cst_91 = arith.constant 0.000000e+00 : f32
    %151 = vector.broadcast %cst_91 : f32 to vector<8x256xf32>
    %152 = arith.maximumf %150, %151 : vector<8x256xf32>
    %c0_92 = arith.constant 0 : index
    %c2 = arith.constant 2 : index
    %c0_93 = arith.constant 0 : index
    %c0_94 = arith.constant 0 : index
    %153 = vector.load %arg5[%c0_92, %c2, %c0_93, %c0_94] : memref<2x3x8x1xf32, #tpu.memory_space<vmem>>, vector<1x1x8x1xf32>
    %154 = vector.shape_cast %153 : vector<1x1x8x1xf32> to vector<8x1xf32>
    %c0_95 = arith.constant 0 : index
    %c2_96 = arith.constant 2 : index
    %c0_97 = arith.constant 0 : index
    %c0_98 = arith.constant 0 : index
    %155 = vector.load %arg6[%c0_95, %c2_96, %c0_97, %c0_98] : memref<2x3x8x1xf32, #tpu.memory_space<vmem>>, vector<1x1x8x1xf32>
    %156 = vector.shape_cast %155 : vector<1x1x8x1xf32> to vector<8x1xf32>
    %cst_99 = arith.constant dense<0.000000e+00> : vector<8xf32>
    %157 = vector.multi_reduction <add>, %152, %cst_99 [1] : vector<8x256xf32> to vector<8xf32>
    %158 = vector.shape_cast %157 : vector<8xf32> to vector<8x1xf32>
    %cst_100 = arith.constant dense<0.000000e+00> : vector<8x1xf32>
    %159 = tpu.matmul %24, %158, %cst_100 {dimension_numbers = #tpu.dot_dimension_numbers<[1], [0], [0], [1], [0, 0, 1, 1], [], []>} : vector<8x8xf32>, vector<8x1xf32>, vector<8x1xf32> -> vector<8x1xf32>
    %160 = vector.broadcast %159 : vector<8x1xf32> to vector<8x256xf32>
    %161 = arith.subf %152, %160 : vector<8x256xf32>
    %162 = arith.mulf %161, %161 : vector<8x256xf32>
    %cst_101 = arith.constant dense<0.000000e+00> : vector<8xf32>
    %163 = vector.multi_reduction <add>, %162, %cst_101 [1] : vector<8x256xf32> to vector<8xf32>
    %164 = vector.shape_cast %163 : vector<8xf32> to vector<8x1xf32>
    %cst_102 = arith.constant dense<0.000000e+00> : vector<8x1xf32>
    %165 = tpu.matmul %24, %164, %cst_102 {dimension_numbers = #tpu.dot_dimension_numbers<[1], [0], [0], [1], [0, 0, 1, 1], [], []>} : vector<8x8xf32>, vector<8x1xf32>, vector<8x1xf32> -> vector<8x1xf32>
    %cst_103 = arith.constant 9.99999974E-6 : f32
    %166 = vector.broadcast %cst_103 : f32 to vector<8x1xf32>
    %167 = arith.addf %165, %166 : vector<8x1xf32>
    %168 = math.rsqrt %167 : vector<8x1xf32>
    %169 = arith.mulf %168, %154 : vector<8x1xf32>
    %170 = vector.broadcast %169 : vector<8x1xf32> to vector<8x256xf32>
    %171 = arith.mulf %161, %170 : vector<8x256xf32>
    %172 = vector.broadcast %156 : vector<8x1xf32> to vector<8x256xf32>
    %173 = arith.addf %171, %172 : vector<8x256xf32>
    %c1_104 = arith.constant 1 : index
    %c0_105 = arith.constant 0 : index
    %c0_106 = arith.constant 0 : index
    %174 = vector.load %arg3[%c1_104, %c0_105, %c0_106] : memref<2x8x72xf32, #tpu.memory_space<vmem>>, vector<1x8x72xf32>
    %175 = vector.shape_cast %174 : vector<1x8x72xf32> to vector<8x72xf32>
    %c0_107 = arith.constant 0 : index
    %c128_108 = arith.constant 128 : index
    %176 = vector.load %arg9[%c0_107, %c128_108] : memref<8x512xf32, #tpu.memory_space<vmem>>, vector<8x256xf32>
    tpu.vector_store %arg9[%c0_107, %c128_108], %173 {strides = array<i32>} : memref<8x512xf32, #tpu.memory_space<vmem>>, vector<8x256xf32>,
    %c0_109 = arith.constant 0 : index
    %c111_110 = arith.constant 111 : index
    %177 = vector.load %arg9[%c0_109, %c111_110] : memref<8x512xf32, #tpu.memory_space<vmem>>, vector<8x256xf32>
    %cst_111 = arith.constant 0.000000e+00 : f32
    %178 = vector.shape_cast %21 : vector<1x256xi1> to vector<1x256xi1>
    %179 = vector.broadcast %178 : vector<1x256xi1> to vector<8x256xi1>
    %180 = vector.broadcast %cst_111 : f32 to vector<8x256xf32>
    %181 = arith.select %179, %177, %180 : vector<8x256xi1>, vector<8x256xf32>
    %c0_112 = arith.constant 0 : index
    %c112_113 = arith.constant 112 : index
    %182 = vector.load %arg9[%c0_112, %c112_113] : memref<8x512xf32, #tpu.memory_space<vmem>>, vector<8x256xf32>
    %c0_114 = arith.constant 0 : index
    %c113_115 = arith.constant 113 : index
    %183 = vector.load %arg9[%c0_114, %c113_115] : memref<8x512xf32, #tpu.memory_space<vmem>>, vector<8x256xf32>
    %cst_116 = arith.constant 0.000000e+00 : f32
    %184 = vector.shape_cast %23 : vector<1x256xi1> to vector<1x256xi1>
    %185 = vector.broadcast %184 : vector<1x256xi1> to vector<8x256xi1>
    %186 = vector.broadcast %cst_116 : f32 to vector<8x256xf32>
    %187 = arith.select %185, %183, %186 : vector<8x256xi1>, vector<8x256xf32>
    %c0_117 = arith.constant 0 : index
    %c127_118 = arith.constant 127 : index
    %188 = vector.load %arg9[%c0_117, %c127_118] : memref<8x512xf32, #tpu.memory_space<vmem>>, vector<8x256xf32>
    %cst_119 = arith.constant 0.000000e+00 : f32
    %189 = vector.shape_cast %21 : vector<1x256xi1> to vector<1x256xi1>
    %190 = vector.broadcast %189 : vector<1x256xi1> to vector<8x256xi1>
    %191 = vector.broadcast %cst_119 : f32 to vector<8x256xf32>
    %192 = arith.select %190, %188, %191 : vector<8x256xi1>, vector<8x256xf32>
    %c0_120 = arith.constant 0 : index
    %c128_121 = arith.constant 128 : index
    %193 = vector.load %arg9[%c0_120, %c128_121] : memref<8x512xf32, #tpu.memory_space<vmem>>, vector<8x256xf32>
    %c0_122 = arith.constant 0 : index
    %c129_123 = arith.constant 129 : index
    %194 = vector.load %arg9[%c0_122, %c129_123] : memref<8x512xf32, #tpu.memory_space<vmem>>, vector<8x256xf32>
    %cst_124 = arith.constant 0.000000e+00 : f32
    %195 = vector.shape_cast %23 : vector<1x256xi1> to vector<1x256xi1>
    %196 = vector.broadcast %195 : vector<1x256xi1> to vector<8x256xi1>
    %197 = vector.broadcast %cst_124 : f32 to vector<8x256xf32>
    %198 = arith.select %196, %194, %197 : vector<8x256xi1>, vector<8x256xf32>
    %c0_125 = arith.constant 0 : index
    %c143_126 = arith.constant 143 : index
    %199 = vector.load %arg9[%c0_125, %c143_126] : memref<8x512xf32, #tpu.memory_space<vmem>>, vector<8x256xf32>
    %cst_127 = arith.constant 0.000000e+00 : f32
    %200 = vector.shape_cast %21 : vector<1x256xi1> to vector<1x256xi1>
    %201 = vector.broadcast %200 : vector<1x256xi1> to vector<8x256xi1>
    %202 = vector.broadcast %cst_127 : f32 to vector<8x256xf32>
    %203 = arith.select %201, %199, %202 : vector<8x256xi1>, vector<8x256xf32>
    %c0_128 = arith.constant 0 : index
    %c144_129 = arith.constant 144 : index
    %204 = vector.load %arg9[%c0_128, %c144_129] : memref<8x512xf32, #tpu.memory_space<vmem>>, vector<8x256xf32>
    %c0_130 = arith.constant 0 : index
    %c145_131 = arith.constant 145 : index
    %205 = vector.load %arg9[%c0_130, %c145_131] : memref<8x512xf32, #tpu.memory_space<vmem>>, vector<8x256xf32>
    %cst_132 = arith.constant 0.000000e+00 : f32
    %206 = vector.shape_cast %23 : vector<1x256xi1> to vector<1x256xi1>
    %207 = vector.broadcast %206 : vector<1x256xi1> to vector<8x256xi1>
    %208 = vector.broadcast %cst_132 : f32 to vector<8x256xf32>
    %209 = arith.select %207, %205, %208 : vector<8x256xi1>, vector<8x256xf32>
    %210 = tpu.concatenate %181, %182, %187, %192, %193, %198, %203, %204, %209 in 0 : vector<8x256xf32>, vector<8x256xf32>, vector<8x256xf32>, vector<8x256xf32>, vector<8x256xf32>, vector<8x256xf32>, vector<8x256xf32>, vector<8x256xf32>, vector<8x256xf32> -> vector<72x256xf32>
    %cst_133 = arith.constant dense<0.000000e+00> : vector<8x256xf32>
    %211 = tpu.matmul %175, %210, %cst_133 {dimension_numbers = #tpu.dot_dimension_numbers<[1], [0], [0], [1], [0, 0, 1, 1], [], []>} : vector<8x72xf32>, vector<72x256xf32>, vector<8x256xf32> -> vector<8x256xf32>
    %c1_134 = arith.constant 1 : index
    %c0_135 = arith.constant 0 : index
    %c0_136 = arith.constant 0 : index
    %c0_137 = arith.constant 0 : index
    %212 = vector.load %arg5[%c1_134, %c0_135, %c0_136, %c0_137] : memref<2x3x8x1xf32, #tpu.memory_space<vmem>>, vector<1x1x8x1xf32>
    %213 = vector.shape_cast %212 : vector<1x1x8x1xf32> to vector<8x1xf32>
    %c1_138 = arith.constant 1 : index
    %c0_139 = arith.constant 0 : index
    %c0_140 = arith.constant 0 : index
    %c0_141 = arith.constant 0 : index
    %214 = vector.load %arg6[%c1_138, %c0_139, %c0_140, %c0_141] : memref<2x3x8x1xf32, #tpu.memory_space<vmem>>, vector<1x1x8x1xf32>
    %215 = vector.shape_cast %214 : vector<1x1x8x1xf32> to vector<8x1xf32>
    %cst_142 = arith.constant dense<0.000000e+00> : vector<8xf32>
    %216 = vector.multi_reduction <add>, %211, %cst_142 [1] : vector<8x256xf32> to vector<8xf32>
    %217 = vector.shape_cast %216 : vector<8xf32> to vector<8x1xf32>
    %cst_143 = arith.constant dense<0.000000e+00> : vector<8x1xf32>
    %218 = tpu.matmul %24, %217, %cst_143 {dimension_numbers = #tpu.dot_dimension_numbers<[1], [0], [0], [1], [0, 0, 1, 1], [], []>} : vector<8x8xf32>, vector<8x1xf32>, vector<8x1xf32> -> vector<8x1xf32>
    %219 = vector.broadcast %218 : vector<8x1xf32> to vector<8x256xf32>
    %220 = arith.subf %211, %219 : vector<8x256xf32>
    %221 = arith.mulf %220, %220 : vector<8x256xf32>
    %cst_144 = arith.constant dense<0.000000e+00> : vector<8xf32>
    %222 = vector.multi_reduction <add>, %221, %cst_144 [1] : vector<8x256xf32> to vector<8xf32>
    %223 = vector.shape_cast %222 : vector<8xf32> to vector<8x1xf32>
    %cst_145 = arith.constant dense<0.000000e+00> : vector<8x1xf32>
    %224 = tpu.matmul %24, %223, %cst_145 {dimension_numbers = #tpu.dot_dimension_numbers<[1], [0], [0], [1], [0, 0, 1, 1], [], []>} : vector<8x8xf32>, vector<8x1xf32>, vector<8x1xf32> -> vector<8x1xf32>
    %cst_146 = arith.constant 9.99999974E-6 : f32
    %225 = vector.broadcast %cst_146 : f32 to vector<8x1xf32>
    %226 = arith.addf %224, %225 : vector<8x1xf32>
    %227 = math.rsqrt %226 : vector<8x1xf32>
    %228 = arith.mulf %227, %213 : vector<8x1xf32>
    %229 = vector.broadcast %228 : vector<8x1xf32> to vector<8x256xf32>
    %230 = arith.mulf %220, %229 : vector<8x256xf32>
    %231 = vector.broadcast %215 : vector<8x1xf32> to vector<8x256xf32>
    %232 = arith.addf %230, %231 : vector<8x256xf32>
    %cst_147 = arith.constant 0.000000e+00 : f32
    %233 = vector.broadcast %cst_147 : f32 to vector<8x256xf32>
    %234 = arith.maximumf %232, %233 : vector<8x256xf32>
    %c1_148 = arith.constant 1 : index
    %c0_149 = arith.constant 0 : index
    %c0_150 = arith.constant 0 : index
    %235 = vector.load %arg4[%c1_148, %c0_149, %c0_150] : memref<2x8x72xf32, #tpu.memory_space<vmem>>, vector<1x8x72xf32>
    %236 = vector.shape_cast %235 : vector<1x8x72xf32> to vector<8x72xf32>
    %c0_151 = arith.constant 0 : index
    %c128_152 = arith.constant 128 : index
    %237 = vector.load %arg9[%c0_151, %c128_152] : memref<8x512xf32, #tpu.memory_space<vmem>>, vector<8x256xf32>
    tpu.vector_store %arg9[%c0_151, %c128_152], %234 {strides = array<i32>} : memref<8x512xf32, #tpu.memory_space<vmem>>, vector<8x256xf32>,
    %c0_153 = arith.constant 0 : index
    %c111_154 = arith.constant 111 : index
    %238 = vector.load %arg9[%c0_153, %c111_154] : memref<8x512xf32, #tpu.memory_space<vmem>>, vector<8x256xf32>
    %cst_155 = arith.constant 0.000000e+00 : f32
    %239 = vector.shape_cast %21 : vector<1x256xi1> to vector<1x256xi1>
    %240 = vector.broadcast %239 : vector<1x256xi1> to vector<8x256xi1>
    %241 = vector.broadcast %cst_155 : f32 to vector<8x256xf32>
    %242 = arith.select %240, %238, %241 : vector<8x256xi1>, vector<8x256xf32>
    %c0_156 = arith.constant 0 : index
    %c112_157 = arith.constant 112 : index
    %243 = vector.load %arg9[%c0_156, %c112_157] : memref<8x512xf32, #tpu.memory_space<vmem>>, vector<8x256xf32>
    %c0_158 = arith.constant 0 : index
    %c113_159 = arith.constant 113 : index
    %244 = vector.load %arg9[%c0_158, %c113_159] : memref<8x512xf32, #tpu.memory_space<vmem>>, vector<8x256xf32>
    %cst_160 = arith.constant 0.000000e+00 : f32
    %245 = vector.shape_cast %23 : vector<1x256xi1> to vector<1x256xi1>
    %246 = vector.broadcast %245 : vector<1x256xi1> to vector<8x256xi1>
    %247 = vector.broadcast %cst_160 : f32 to vector<8x256xf32>
    %248 = arith.select %246, %244, %247 : vector<8x256xi1>, vector<8x256xf32>
    %c0_161 = arith.constant 0 : index
    %c127_162 = arith.constant 127 : index
    %249 = vector.load %arg9[%c0_161, %c127_162] : memref<8x512xf32, #tpu.memory_space<vmem>>, vector<8x256xf32>
    %cst_163 = arith.constant 0.000000e+00 : f32
    %250 = vector.shape_cast %21 : vector<1x256xi1> to vector<1x256xi1>
    %251 = vector.broadcast %250 : vector<1x256xi1> to vector<8x256xi1>
    %252 = vector.broadcast %cst_163 : f32 to vector<8x256xf32>
    %253 = arith.select %251, %249, %252 : vector<8x256xi1>, vector<8x256xf32>
    %c0_164 = arith.constant 0 : index
    %c128_165 = arith.constant 128 : index
    %254 = vector.load %arg9[%c0_164, %c128_165] : memref<8x512xf32, #tpu.memory_space<vmem>>, vector<8x256xf32>
    %c0_166 = arith.constant 0 : index
    %c129_167 = arith.constant 129 : index
    %255 = vector.load %arg9[%c0_166, %c129_167] : memref<8x512xf32, #tpu.memory_space<vmem>>, vector<8x256xf32>
    %cst_168 = arith.constant 0.000000e+00 : f32
    %256 = vector.shape_cast %23 : vector<1x256xi1> to vector<1x256xi1>
    %257 = vector.broadcast %256 : vector<1x256xi1> to vector<8x256xi1>
    %258 = vector.broadcast %cst_168 : f32 to vector<8x256xf32>
    %259 = arith.select %257, %255, %258 : vector<8x256xi1>, vector<8x256xf32>
    %c0_169 = arith.constant 0 : index
    %c143_170 = arith.constant 143 : index
    %260 = vector.load %arg9[%c0_169, %c143_170] : memref<8x512xf32, #tpu.memory_space<vmem>>, vector<8x256xf32>
    %cst_171 = arith.constant 0.000000e+00 : f32
    %261 = vector.shape_cast %21 : vector<1x256xi1> to vector<1x256xi1>
    %262 = vector.broadcast %261 : vector<1x256xi1> to vector<8x256xi1>
    %263 = vector.broadcast %cst_171 : f32 to vector<8x256xf32>
    %264 = arith.select %262, %260, %263 : vector<8x256xi1>, vector<8x256xf32>
    %c0_172 = arith.constant 0 : index
    %c144_173 = arith.constant 144 : index
    %265 = vector.load %arg9[%c0_172, %c144_173] : memref<8x512xf32, #tpu.memory_space<vmem>>, vector<8x256xf32>
    %c0_174 = arith.constant 0 : index
    %c145_175 = arith.constant 145 : index
    %266 = vector.load %arg9[%c0_174, %c145_175] : memref<8x512xf32, #tpu.memory_space<vmem>>, vector<8x256xf32>
    %cst_176 = arith.constant 0.000000e+00 : f32
    %267 = vector.shape_cast %23 : vector<1x256xi1> to vector<1x256xi1>
    %268 = vector.broadcast %267 : vector<1x256xi1> to vector<8x256xi1>
    %269 = vector.broadcast %cst_176 : f32 to vector<8x256xf32>
    %270 = arith.select %268, %266, %269 : vector<8x256xi1>, vector<8x256xf32>
    %271 = tpu.concatenate %242, %243, %248, %253, %254, %259, %264, %265, %270 in 0 : vector<8x256xf32>, vector<8x256xf32>, vector<8x256xf32>, vector<8x256xf32>, vector<8x256xf32>, vector<8x256xf32>, vector<8x256xf32>, vector<8x256xf32>, vector<8x256xf32> -> vector<72x256xf32>
    %cst_177 = arith.constant dense<0.000000e+00> : vector<8x256xf32>
    %272 = tpu.matmul %236, %271, %cst_177 {dimension_numbers = #tpu.dot_dimension_numbers<[1], [0], [0], [1], [0, 0, 1, 1], [], []>} : vector<8x72xf32>, vector<72x256xf32>, vector<8x256xf32> -> vector<8x256xf32>
    %c1_178 = arith.constant 1 : index
    %c1_179 = arith.constant 1 : index
    %c0_180 = arith.constant 0 : index
    %c0_181 = arith.constant 0 : index
    %273 = vector.load %arg5[%c1_178, %c1_179, %c0_180, %c0_181] : memref<2x3x8x1xf32, #tpu.memory_space<vmem>>, vector<1x1x8x1xf32>
    %274 = vector.shape_cast %273 : vector<1x1x8x1xf32> to vector<8x1xf32>
    %c1_182 = arith.constant 1 : index
    %c1_183 = arith.constant 1 : index
    %c0_184 = arith.constant 0 : index
    %c0_185 = arith.constant 0 : index
    %275 = vector.load %arg6[%c1_182, %c1_183, %c0_184, %c0_185] : memref<2x3x8x1xf32, #tpu.memory_space<vmem>>, vector<1x1x8x1xf32>
    %276 = vector.shape_cast %275 : vector<1x1x8x1xf32> to vector<8x1xf32>
    %cst_186 = arith.constant dense<0.000000e+00> : vector<8xf32>
    %277 = vector.multi_reduction <add>, %272, %cst_186 [1] : vector<8x256xf32> to vector<8xf32>
    %278 = vector.shape_cast %277 : vector<8xf32> to vector<8x1xf32>
    %cst_187 = arith.constant dense<0.000000e+00> : vector<8x1xf32>
    %279 = tpu.matmul %24, %278, %cst_187 {dimension_numbers = #tpu.dot_dimension_numbers<[1], [0], [0], [1], [0, 0, 1, 1], [], []>} : vector<8x8xf32>, vector<8x1xf32>, vector<8x1xf32> -> vector<8x1xf32>
    %280 = vector.broadcast %279 : vector<8x1xf32> to vector<8x256xf32>
    %281 = arith.subf %272, %280 : vector<8x256xf32>
    %282 = arith.mulf %281, %281 : vector<8x256xf32>
    %cst_188 = arith.constant dense<0.000000e+00> : vector<8xf32>
    %283 = vector.multi_reduction <add>, %282, %cst_188 [1] : vector<8x256xf32> to vector<8xf32>
    %284 = vector.shape_cast %283 : vector<8xf32> to vector<8x1xf32>
    %cst_189 = arith.constant dense<0.000000e+00> : vector<8x1xf32>
    %285 = tpu.matmul %24, %284, %cst_189 {dimension_numbers = #tpu.dot_dimension_numbers<[1], [0], [0], [1], [0, 0, 1, 1], [], []>} : vector<8x8xf32>, vector<8x1xf32>, vector<8x1xf32> -> vector<8x1xf32>
    %cst_190 = arith.constant 9.99999974E-6 : f32
    %286 = vector.broadcast %cst_190 : f32 to vector<8x1xf32>
    %287 = arith.addf %285, %286 : vector<8x1xf32>
    %288 = math.rsqrt %287 : vector<8x1xf32>
    %289 = arith.mulf %288, %274 : vector<8x1xf32>
    %290 = vector.broadcast %289 : vector<8x1xf32> to vector<8x256xf32>
    %291 = arith.mulf %281, %290 : vector<8x256xf32>
    %292 = vector.broadcast %276 : vector<8x1xf32> to vector<8x256xf32>
    %293 = arith.addf %291, %292 : vector<8x256xf32>
    %294 = arith.addf %293, %173 : vector<8x256xf32>
    %cst_191 = arith.constant 0.000000e+00 : f32
    %295 = vector.broadcast %cst_191 : f32 to vector<8x256xf32>
    %296 = arith.maximumf %294, %295 : vector<8x256xf32>
    %c1_192 = arith.constant 1 : index
    %c2_193 = arith.constant 2 : index
    %c0_194 = arith.constant 0 : index
    %c0_195 = arith.constant 0 : index
    %297 = vector.load %arg5[%c1_192, %c2_193, %c0_194, %c0_195] : memref<2x3x8x1xf32, #tpu.memory_space<vmem>>, vector<1x1x8x1xf32>
    %298 = vector.shape_cast %297 : vector<1x1x8x1xf32> to vector<8x1xf32>
    %c1_196 = arith.constant 1 : index
    %c2_197 = arith.constant 2 : index
    %c0_198 = arith.constant 0 : index
    %c0_199 = arith.constant 0 : index
    %299 = vector.load %arg6[%c1_196, %c2_197, %c0_198, %c0_199] : memref<2x3x8x1xf32, #tpu.memory_space<vmem>>, vector<1x1x8x1xf32>
    %300 = vector.shape_cast %299 : vector<1x1x8x1xf32> to vector<8x1xf32>
    %cst_200 = arith.constant dense<0.000000e+00> : vector<8xf32>
    %301 = vector.multi_reduction <add>, %296, %cst_200 [1] : vector<8x256xf32> to vector<8xf32>
    %302 = vector.shape_cast %301 : vector<8xf32> to vector<8x1xf32>
    %cst_201 = arith.constant dense<0.000000e+00> : vector<8x1xf32>
    %303 = tpu.matmul %24, %302, %cst_201 {dimension_numbers = #tpu.dot_dimension_numbers<[1], [0], [0], [1], [0, 0, 1, 1], [], []>} : vector<8x8xf32>, vector<8x1xf32>, vector<8x1xf32> -> vector<8x1xf32>
    %304 = vector.broadcast %303 : vector<8x1xf32> to vector<8x256xf32>
    %305 = arith.subf %296, %304 : vector<8x256xf32>
    %306 = arith.mulf %305, %305 : vector<8x256xf32>
    %cst_202 = arith.constant dense<0.000000e+00> : vector<8xf32>
    %307 = vector.multi_reduction <add>, %306, %cst_202 [1] : vector<8x256xf32> to vector<8xf32>
    %308 = vector.shape_cast %307 : vector<8xf32> to vector<8x1xf32>
    %cst_203 = arith.constant dense<0.000000e+00> : vector<8x1xf32>
    %309 = tpu.matmul %24, %308, %cst_203 {dimension_numbers = #tpu.dot_dimension_numbers<[1], [0], [0], [1], [0, 0, 1, 1], [], []>} : vector<8x8xf32>, vector<8x1xf32>, vector<8x1xf32> -> vector<8x1xf32>
    %cst_204 = arith.constant 9.99999974E-6 : f32
    %310 = vector.broadcast %cst_204 : f32 to vector<8x1xf32>
    %311 = arith.addf %309, %310 : vector<8x1xf32>
    %312 = math.rsqrt %311 : vector<8x1xf32>
    %313 = arith.mulf %312, %298 : vector<8x1xf32>
    %314 = vector.broadcast %313 : vector<8x1xf32> to vector<8x256xf32>
    %315 = arith.mulf %305, %314 : vector<8x256xf32>
    %316 = vector.broadcast %300 : vector<8x1xf32> to vector<8x256xf32>
    %317 = arith.addf %315, %316 : vector<8x256xf32>
    %c0_205 = arith.constant 0 : index
    %c0_206 = arith.constant 0 : index
    %c0_207 = arith.constant 0 : index
    %318 = vector.load %arg8[%c0_205, %c0_206, %c0_207] : memref<1x8x256xf32, #tpu.memory_space<vmem>>, vector<1x8x256xf32>
    %319 = vector.shape_cast %318 : vector<1x8x256xf32> to vector<8x256xf32>
    %320 = vector.shape_cast %317 : vector<8x256xf32> to vector<1x8x256xf32>
    tpu.vector_store %arg8[%c0_205, %c0_206, %c0_207], %320 {strides = array<i32>} : memref<1x8x256xf32, #tpu.memory_space<vmem>>, vector<1x8x256xf32>,
    return
  }
  func.func @transform_0(%arg0: i32) -> (i32, i32, i32) {
    %c0_i32 = arith.constant 0 : i32
    %c0_i32_0 = arith.constant 0 : i32
    %c0_i32_1 = arith.constant 0 : i32
    return %arg0, %c0_i32, %c0_i32_0 : i32, i32, i32
  }
  func.func @transform_1(%arg0: i32) -> (i32, i32, i32) {
    %c0_i32 = arith.constant 0 : i32
    %c0_i32_0 = arith.constant 0 : i32
    %c0_i32_1 = arith.constant 0 : i32
    return %arg0, %c0_i32, %c0_i32_0 : i32, i32, i32
  }
  func.func @transform_2(%arg0: i32) -> (i32, i32, i32) {
    %c0_i32 = arith.constant 0 : i32
    %c0_i32_0 = arith.constant 0 : i32
    %c0_i32_1 = arith.constant 0 : i32
    %c0_i32_2 = arith.constant 0 : i32
    return %c0_i32, %c0_i32_0, %c0_i32_1 : i32, i32, i32
  }
  func.func @transform_3(%arg0: i32) -> (i32, i32, i32) {
    %c0_i32 = arith.constant 0 : i32
    %c0_i32_0 = arith.constant 0 : i32
    %c0_i32_1 = arith.constant 0 : i32
    %c0_i32_2 = arith.constant 0 : i32
    return %c0_i32, %c0_i32_0, %c0_i32_1 : i32, i32, i32
  }
  func.func @transform_4(%arg0: i32) -> (i32, i32, i32, i32) {
    %c0_i32 = arith.constant 0 : i32
    %c0_i32_0 = arith.constant 0 : i32
    %c0_i32_1 = arith.constant 0 : i32
    %c0_i32_2 = arith.constant 0 : i32
    %c0_i32_3 = arith.constant 0 : i32
    return %c0_i32, %c0_i32_0, %c0_i32_1, %c0_i32_2 : i32, i32, i32, i32
  }
  func.func @transform_5(%arg0: i32) -> (i32, i32, i32, i32) {
    %c0_i32 = arith.constant 0 : i32
    %c0_i32_0 = arith.constant 0 : i32
    %c0_i32_1 = arith.constant 0 : i32
    %c0_i32_2 = arith.constant 0 : i32
    %c0_i32_3 = arith.constant 0 : i32
    return %c0_i32, %c0_i32_0, %c0_i32_1, %c0_i32_2 : i32, i32, i32, i32
  }
  func.func @transform_6(%arg0: i32) -> (i32, i32) {
    %c0_i32 = arith.constant 0 : i32
    %c0_i32_0 = arith.constant 0 : i32
    %c0_i32_1 = arith.constant 0 : i32
    return %c0_i32, %c0_i32_0 : i32, i32
  }
  func.func @transform_7(%arg0: i32) -> (i32, i32, i32) {
    %c0_i32 = arith.constant 0 : i32
    %c0_i32_0 = arith.constant 0 : i32
    %c0_i32_1 = arith.constant 0 : i32
    return %arg0, %c0_i32, %c0_i32_0 : i32, i32, i32
  }
}

</mosaic_0001>

<llo_original>
// kernel: tpu_custom_call.1
$region0: #{tpu_custom_call.1}
  #allocation0 [shape = 'u32[]', space=smem, size = 0x4, offset = 0x4, fixed_abs, tag = 'smem constant byte address 0x4 - core index']
  #allocation1 [shape = 'u32[144,128]{1,0:T(1,128)}', space=vmem, size = 0x12000, scoped, tag = 'internal scratch']
  #allocation2 [shape = 'f32[8,512]{1,0:T(8,128)}', space=vmem, size = 0x4000, scoped, tag = 'scratch operand']
  %s0 = inlined_call_operand.vmem [shape: f32[2,8,256], index: 0, kind: input, shape index: {}]
  %s1 = inlined_call_operand.vmem [shape: f32[2,8,256], index: 1, kind: input, shape index: {}]
  %s2 = inlined_call_operand.vmem [shape: f32[2,8,72], index: 2, kind: input, shape index: {}]
  %s3 = inlined_call_operand.vmem [shape: f32[2,8,72], index: 3, kind: input, shape index: {}]
  %s4 = inlined_call_operand.vmem [shape: f32[2,3,8,1], index: 4, kind: input, shape index: {}]
  %s5 = inlined_call_operand.vmem [shape: f32[2,3,8,1], index: 5, kind: input, shape index: {}]
  %s6 = inlined_call_operand.vmem [shape: f32[8,8], index: 6, kind: input, shape index: {}]
  %s7 = inlined_call_operand.hbm [shape: f32[2,8,256], index: 7, kind: output, shape index: {}]
  %s8 = sld [smem:[#allocation0]]
  $region61: #{tpu_custom_call.1} parent=0
    _
  %s10 = ssub.s32 1, %s8
  %s11 = scalar_select 0, %s10, %s8
  $region1: #{tpu_custom_call.1} parent=0
    #allocation3 [shape = 'u8[16384]{0}', space=vmem, size = 0x4000, scoped, tag = 'output window, operand 0']
    #allocation4 [shape = 's32[2]{0}', space=sflag, size = 0x8, scoped, tag = 'scoped memory for tpu_custom_call.1']
    %12 = vsyncpa [#allocation4], 0
    %s13 = scalar_lea.sflag [#allocation4], 1
    %14 = vsyncpa %s13, 0
    loop: start=0, step=1, limit=4
    $region2: #{tpu_custom_call.1} parent=1 // loop_pre_header
      _
    $region3: #{tpu_custom_call.1} parent=1 // loop_header
      %s16 = sphi 0, %s20
      %p17 = scmp.ge.s32.totalorder %s16, 4
      %s26 = sphi 0, %s28
      %s29 = sphi 0, %s26
      %s30 = sphi 0, %s29
      %s46 = sphi 0, %s30
      %s52 = sphi 0, %s54
      %s55 = sphi 0, %s52
      %s56 = sphi 0, %s55
      %s72 = sphi 0, %s56
      %s76 = sphi 0, %s76
      %s78 = sphi 0, %s76
      %s79 = sphi 0, %s78
      %s93 = sphi 0, %s79
      %s97 = sphi 0, %s97
      %s99 = sphi 0, %s97
      %s100 = sphi 0, %s99
      %s114 = sphi 0, %s100
      %s118 = sphi 0, %s118
      %s120 = sphi 0, %s118
      %s121 = sphi 0, %s120
      %s135 = sphi 0, %s121
      %s139 = sphi 0, %s139
      %s141 = sphi 0, %s139
      %s142 = sphi 0, %s141
      %s156 = sphi 0, %s142
      %s160 = sphi 0, %s160
      %s162 = sphi 0, %s160
      %s163 = sphi 0, %s162
      %s177 = sphi 0, %s163
      %s183 = sphi 0, %s185
      %s186 = sphi 0, %s183
      %s187 = sphi 0, %s186
      %s203 = sphi 0, %s187
    $region4: #{tpu_custom_call.1} parent=1 // loop_header_branch
      %19 = sbr.rel (%p17) target = $region8
    $region5: #{tpu_custom_call.1} parent=1 // loop_body
      %s21 = ssub.s32 %s16, 1
      %s22 = ssub.s32 %s16, 2
      %s23 = sadd.s32 %s16, 1
      %s24 = ssub.s32 %s16, %s23
      %p25 = scmp.eq.s32.totalorder %s24, 0
      %s27 = sadd.s32 %s26, 1
      %s28 = scalar_select %p25, %s26, %s27
      %p31 = pneg %p25
      %p32 = scmp.eq.s32.totalorder %s16, 1
      %p33 = por %p31, %p32
      %p34 = scmp.ne.s32.totalorder %s26, %s29
      %p35 = scmp.eq.s32.totalorder %s16, 0
      %p36 = por %p34, %p35
      %p37 = scmp.ne.s32.totalorder %s26, %s29
      %p38 = scmp.eq.s32.totalorder %s21, 1
      %p39 = por %p37, %p38
      %p40 = scmp.ne.s32.totalorder %s29, %s30
      %p41 = scmp.eq.s32.totalorder %s21, 0
      %p42 = por %p40, %p41
      %p43 = scmp.ne.s32.totalorder %s29, %s30
      %p44 = scmp.eq.s32.totalorder %s22, 1
      %p45 = por %p43, %p44
      %p47 = scmp.ne.s32.totalorder %s30, %s46
      %p48 = scmp.eq.s32.totalorder %s22, 0
      %p49 = por %p47, %p48
      %s50 = ssub.s32 %s16, %s23
      %p51 = scmp.eq.s32.totalorder %s50, 0
      %s53 = sadd.s32 %s52, 1
      %s54 = scalar_select %p51, %s52, %s53
      %p57 = pneg %p51
      %p58 = scmp.eq.s32.totalorder %s16, 1
      %p59 = por %p57, %p58
      %p60 = scmp.ne.s32.totalorder %s52, %s55
      %p61 = scmp.eq.s32.totalorder %s16, 0
      %p62 = por %p60, %p61
      %p63 = scmp.ne.s32.totalorder %s52, %s55
      %p64 = scmp.eq.s32.totalorder %s21, 1
      %p65 = por %p63, %p64
      %p66 = scmp.ne.s32.totalorder %s55, %s56
      %p67 = scmp.eq.s32.totalorder %s21, 0
      %p68 = por %p66, %p67
      %p69 = scmp.ne.s32.totalorder %s55, %s56
      %p70 = scmp.eq.s32.totalorder %s22, 1
      %p71 = por %p69, %p70
      %p73 = scmp.ne.s32.totalorder %s56, %s72
      %p74 = scmp.eq.s32.totalorder %s22, 0
      %p75 = por %p73, %p74
      %s77 = sadd.s32 %s76, 1
      %p80 = scmp.eq.s32.totalorder %s16, 1
      %p81 = scmp.ne.s32.totalorder %s76, %s78
      %p82 = scmp.eq.s32.totalorder %s16, 0
      %p83 = por %p81, %p82
      %p84 = scmp.ne.s32.totalorder %s76, %s78
      %p85 = scmp.eq.s32.totalorder %s21, 1
      %p86 = por %p84, %p85
      %p87 = scmp.ne.s32.totalorder %s78, %s79
      %p88 = scmp.eq.s32.totalorder %s21, 0
      %p89 = por %p87, %p88
      %p90 = scmp.ne.s32.totalorder %s78, %s79
      %p91 = scmp.eq.s32.totalorder %s22, 1
      %p92 = por %p90, %p91
      %p94 = scmp.ne.s32.totalorder %s79, %s93
      %p95 = scmp.eq.s32.totalorder %s22, 0
      %p96 = por %p94, %p95
      %s98 = sadd.s32 %s97, 1
      %p101 = scmp.eq.s32.totalorder %s16, 1
      %p102 = scmp.ne.s32.totalorder %s97, %s99
      %p103 = scmp.eq.s32.totalorder %s16, 0
      %p104 = por %p102, %p103
      %p105 = scmp.ne.s32.totalorder %s97, %s99
      %p106 = scmp.eq.s32.totalorder %s21, 1
      %p107 = por %p105, %p106
      %p108 = scmp.ne.s32.totalorder %s99, %s100
      %p109 = scmp.eq.s32.totalorder %s21, 0
      %p110 = por %p108, %p109
      %p111 = scmp.ne.s32.totalorder %s99, %s100
      %p112 = scmp.eq.s32.totalorder %s22, 1
      %p113 = por %p111, %p112
      %p115 = scmp.ne.s32.totalorder %s100, %s114
      %p116 = scmp.eq.s32.totalorder %s22, 0
      %p117 = por %p115, %p116
      %s119 = sadd.s32 %s118, 1
      %p122 = scmp.eq.s32.totalorder %s16, 1
      %p123 = scmp.ne.s32.totalorder %s118, %s120
      %p124 = scmp.eq.s32.totalorder %s16, 0
      %p125 = por %p123, %p124
      %p126 = scmp.ne.s32.totalorder %s118, %s120
      %p127 = scmp.eq.s32.totalorder %s21, 1
      %p128 = por %p126, %p127
      %p129 = scmp.ne.s32.totalorder %s120, %s121
      %p130 = scmp.eq.s32.totalorder %s21, 0
      %p131 = por %p129, %p130
      %p132 = scmp.ne.s32.totalorder %s120, %s121
      %p133 = scmp.eq.s32.totalorder %s22, 1
      %p134 = por %p132, %p133
      %p136 = scmp.ne.s32.totalorder %s121, %s135
      %p137 = scmp.eq.s32.totalorder %s22, 0
      %p138 = por %p136, %p137
      %s140 = sadd.s32 %s139, 1
      %p143 = scmp.eq.s32.totalorder %s16, 1
      %p144 = scmp.ne.s32.totalorder %s139, %s141
      %p145 = scmp.eq.s32.totalorder %s16, 0
      %p146 = por %p144, %p145
      %p147 = scmp.ne.s32.totalorder %s139, %s141
      %p148 = scmp.eq.s32.totalorder %s21, 1
      %p149 = por %p147, %p148
      %p150 = scmp.ne.s32.totalorder %s141, %s142
      %p151 = scmp.eq.s32.totalorder %s21, 0
      %p152 = por %p150, %p151
      %p153 = scmp.ne.s32.totalorder %s141, %s142
      %p154 = scmp.eq.s32.totalorder %s22, 1
      %p155 = por %p153, %p154
      %p157 = scmp.ne.s32.totalorder %s142, %s156
      %p158 = scmp.eq.s32.totalorder %s22, 0
      %p159 = por %p157, %p158
      %s161 = sadd.s32 %s160, 1
      %p164 = scmp.eq.s32.totalorder %s16, 1
      %p165 = scmp.ne.s32.totalorder %s160, %s162
      %p166 = scmp.eq.s32.totalorder %s16, 0
      %p167 = por %p165, %p166
      %p168 = scmp.ne.s32.totalorder %s160, %s162
      %p169 = scmp.eq.s32.totalorder %s21, 1
      %p170 = por %p168, %p169
      %p171 = scmp.ne.s32.totalorder %s162, %s163
      %p172 = scmp.eq.s32.totalorder %s21, 0
      %p173 = por %p171, %p172
      %p174 = scmp.ne.s32.totalorder %s162, %s163
      %p175 = scmp.eq.s32.totalorder %s22, 1
      %p176 = por %p174, %p175
      %p178 = scmp.ne.s32.totalorder %s163, %s177
      %p179 = scmp.eq.s32.totalorder %s22, 0
      %p180 = por %p178, %p179
      %s181 = ssub.s32 %s16, %s23
      %p182 = scmp.eq.s32.totalorder %s181, 0
      %s184 = sadd.s32 %s183, 1
      %s185 = scalar_select %p182, %s183, %s184
      %p188 = pneg %p182
      %p189 = scmp.eq.s32.totalorder %s16, 1
      %p190 = por %p188, %p189
      %p191 = scmp.ne.s32.totalorder %s183, %s186
      %p192 = scmp.eq.s32.totalorder %s16, 0
      %p193 = por %p191, %p192
      %p194 = scmp.ne.s32.totalorder %s183, %s186
      %p195 = scmp.eq.s32.totalorder %s21, 1
      %p196 = por %p194, %p195
      %p197 = scmp.ne.s32.totalorder %s186, %s187
      %p198 = scmp.eq.s32.totalorder %s21, 0
      %p199 = por %p197, %p198
      %p200 = scmp.ne.s32.totalorder %s186, %s187
      %p201 = scmp.eq.s32.totalorder %s22, 1
      %p202 = por %p200, %p201
      %p204 = scmp.ne.s32.totalorder %s187, %s203
      %p205 = scmp.eq.s32.totalorder %s22, 0
      %p206 = por %p204, %p205
      %p207 = scmp.le.s32.totalorder 1, %s16
      %p208 = scmp.lt.s32.totalorder %s16, 3
      %p209 = pnand %p207, %p208
      %p210 = pneg %p209
      // Predicated region
      $region9: #{tpu_custom_call.1} parent=5 // pred_check
        _
      $region10: #{tpu_custom_call.1} parent=5 // pred_check_branch
        %212 = sbr.rel (%p209) target = $region12
      $region11: #{tpu_custom_call.1} parent=5 // pred_region
        %s213 = ssub.s32 %s16, 1
        // Predicated region
        $region13: #{tpu_custom_call.1} parent=11 // pred_check
          %p214 = pneg %p89
        $region14: #{tpu_custom_call.1} parent=11 // pred_check_branch
          %216 = sbr.rel (%p214) target = $region16
        $region15: #{tpu_custom_call.1} parent=11 // pred_region
          _
        $region16: #{tpu_custom_call.1} parent=11 // pred_fallthru
          _
        // Predicated region
        $region17: #{tpu_custom_call.1} parent=11 // pred_check
          %p217 = pneg %p110
        $region18: #{tpu_custom_call.1} parent=11 // pred_check_branch
          %219 = sbr.rel (%p217) target = $region20
        $region19: #{tpu_custom_call.1} parent=11 // pred_region
          _
        $region20: #{tpu_custom_call.1} parent=11 // pred_fallthru
          _
        // Predicated region
        $region21: #{tpu_custom_call.1} parent=11 // pred_check
          %p220 = pneg %p131
        $region22: #{tpu_custom_call.1} parent=11 // pred_check_branch
          %222 = sbr.rel (%p220) target = $region24
        $region23: #{tpu_custom_call.1} parent=11 // pred_region
          _
        $region24: #{tpu_custom_call.1} parent=11 // pred_fallthru
          _
        // Predicated region
        $region25: #{tpu_custom_call.1} parent=11 // pred_check
          %p223 = pneg %p152
        $region26: #{tpu_custom_call.1} parent=11 // pred_check_branch
          %225 = sbr.rel (%p223) target = $region28
        $region27: #{tpu_custom_call.1} parent=11 // pred_region
          _
        $region28: #{tpu_custom_call.1} parent=11 // pred_fallthru
          _
        // Predicated region
        $region29: #{tpu_custom_call.1} parent=11 // pred_check
          %p226 = pneg %p173
        $region30: #{tpu_custom_call.1} parent=11 // pred_check_branch
          %228 = sbr.rel (%p226) target = $region32
        $region31: #{tpu_custom_call.1} parent=11 // pred_region
          _
        $region32: #{tpu_custom_call.1} parent=11 // pred_fallthru
          _
      $region12: #{tpu_custom_call.1} parent=5 // pred_fallthru
        _
      %p229 = scmp.lt.s32.totalorder %s16, 2
      // Predicated region
      $region33: #{tpu_custom_call.1} parent=5 // pred_check
        %p230 = pneg %p229
      $region34: #{tpu_custom_call.1} parent=5 // pred_check_branch
        %232 = sbr.rel (%p230) target = $region36
      $region35: #{tpu_custom_call.1} parent=5 // pred_region
        // Predicated region
        $region37: #{tpu_custom_call.1} parent=35 // pred_check
          %p233 = pneg %p36
        $region38: #{tpu_custom_call.1} parent=35 // pred_check_branch
          %235 = sbr.rel (%p233) target = $region40
        $region39: #{tpu_custom_call.1} parent=35 // pred_region
          %p236 = scmp.lt.s32.totalorder %s16, 1
          %s237 = scalar_select %p236, %s16, 1
          %s238 = smul.addr %s237, 2
          %s239 = smul.addr %s238, 8
          %s240 = scalar_lea.vmem %s0, %s239
        $region40: #{tpu_custom_call.1} parent=35 // pred_fallthru
          _
        // Predicated region
        $region41: #{tpu_custom_call.1} parent=35 // pred_check
          %p241 = pneg %p62
        $region42: #{tpu_custom_call.1} parent=35 // pred_check_branch
          %243 = sbr.rel (%p241) target = $region44
        $region43: #{tpu_custom_call.1} parent=35 // pred_region
          %p244 = scmp.lt.s32.totalorder %s16, 1
          %s245 = scalar_select %p244, %s16, 1
          %s246 = smul.addr %s245, 2
          %s247 = smul.addr %s246, 8
          %s248 = scalar_lea.vmem %s1, %s247
        $region44: #{tpu_custom_call.1} parent=35 // pred_fallthru
          _
      $region36: #{tpu_custom_call.1} parent=5 // pred_fallthru
        _
      %p249 = scmp.le.s32.totalorder 1, %s16
      %p250 = scmp.lt.s32.totalorder %s16, 3
      %p251 = pnand %p249, %p250
      %p252 = pneg %p251
      // Predicated region
      $region45: #{tpu_custom_call.1} parent=5 // pred_check
        _
      $region46: #{tpu_custom_call.1} parent=5 // pred_check_branch
        %254 = sbr.rel (%p251) target = $region48
      $region47: #{tpu_custom_call.1} parent=5 // pred_region
        %s255 = ssub.s32 %s16, 1
        %p256 = scmp.lt.s32.totalorder %s21, 1
        %s257 = scalar_select %p256, %s21, 1
        %s258 = smul.addr %s257, 2
        %s259 = smul.addr %s258, 8
        %s260 = scalar_lea.vmem %s0, %s259
        %p261 = pneg %p42
        %p262 = pneg %p39
        %p263 = scmp.lt.s32.totalorder %s21, 1
        %s264 = scalar_select %p263, %s21, 1
        %s265 = smul.addr %s264, 2
        %s266 = smul.addr %s265, 8
        %s267 = scalar_lea.vmem %s1, %s266
        %p268 = pneg %p68
        %p269 = pneg %p65
        %p270 = pneg %p89
        %p271 = pneg %p86
        %p272 = pneg %p110
        %p273 = pneg %p107
        %p274 = pneg %p131
        %p275 = pneg %p128
        %p276 = pneg %p152
        %p277 = pneg %p149
        %p278 = pneg %p173
        %p279 = pneg %p170
        %p280 = pneg %p199
        %p281 = pneg %p196
        %s282 = sand.u32 %s186, 1
        %s283 = scalar_lea.sflag [#allocation4], %s282
        %s284 = sand.u32 %s186, 1
        %s285 = smul.addr %s284, 16
        %s286 = scalar_lea.vmem [#allocation3], %s285
        %p287 = scmp.lt.s32.totalorder %s21, 1
        %s288 = scalar_select %p287, %s21, 1
        %s289 = smul.addr %s288, 2
        %s290 = smul.addr %s289, 8
        %s291 = scalar_lea.vmem %s0, %s290
        %p292 = scmp.lt.s32.totalorder %s21, 1
        %s293 = scalar_select %p292, %s21, 1
        %s294 = smul.addr %s293, 2
        %s295 = smul.addr %s294, 8
        %s296 = scalar_lea.vmem %s1, %s295
        %297 = vst [vmem:[#allocation2] sm:$0xff] 0.0
        %298 = vst [vmem:[#allocation2 + $0x18] sm:$0xff] 0.0
        %v299 = vlaneseq
        %v300 = vand.u32 %v299, 127
        %v301 = vadd.s32 %v300, 128
        %vm302 = vcmp.lt.s32.totalorder %v300, 0
        %v303 = vsub.s32 0, %v300
        %v304 = vsel %vm302, %v303, %v300
        %v305 = vshrl.u32 %v304, 4
        %v306 = vand.u32 %v304, 15
        %v307 = vsub.s32 0, %v306
        %v308 = vsel %vm302, %v307, %v306
        %vm309 = vcmp.lt.s32.totalorder %v301, 0
        %v310 = vsub.s32 0, %v301
        %v311 = vsel %vm309, %v310, %v301
        %v312 = vshrl.u32 %v311, 4
        %v313 = vand.u32 %v311, 15
        %v314 = vsub.s32 0, %v313
        %v315 = vsel %vm309, %v314, %v313
        %vm316 = vcmp.ne.s32.totalorder %v308, 0
        %vm317 = vcmp.ne.s32.totalorder %v315, 0
        %vm318 = vcmp.lt.s32.totalorder %v308, 0
        %vm319 = vcmp.lt.s32.totalorder %v315, 0
        %vm320 = vmand %vm318, %vm316
        %vm321 = vmand %vm319, %vm317
        %v322 = vadd.s32 %v308, 16
        %v323 = vadd.s32 %v315, 16
        %v324 = vsel %vm320, %v322, %v308
        %v325 = vsel %vm321, %v323, %v315
        %vm326 = vcmp.ge.s32.totalorder %v324, 1
        %vm327 = vcmp.ge.s32.totalorder %v325, 1
        %vm328 = vcmp.le.s32.totalorder %v324, 14
        %vm329 = vcmp.le.s32.totalorder %v325, 14
        %v330 = vld [vmem:[%s6] sm:$0xff]
        %v331 = vld [vmem:[%s291] sm:$0xff]
        %v332 = vld [vmem:[%s291 + $0x8] sm:$0xff]
        %v333 = vld [vmem:[%s2] sm:$0xff]
        %334 = vst [vmem:[#allocation2 + $0x8] sm:$0xff] %v331
        %335 = vst [vmem:[#allocation2 + $0x10] sm:$0xff] %v332
        %v336 = vld [vmem:[#allocation2] sm:$0xff]
        %v337 = vld [vmem:[#allocation2 + $0x8] sm:$0xff]
        %v338 = vld [vmem:[#allocation2 + $0x10] sm:$0xff]
        %v339 = vsel %vm326, 1, 0
        %v340 = vsel %vm327, 1, 0
        %vm341 = vcmp.eq.s32.totalorder %v339, 1
        %vm342 = vcmp.eq.s32.totalorder %v340, 1
        %346 = vrot.lane.b32.xlu0 %v336, 17
        %v347 = vpop.permute.xlu0 %346
        %348 = vrot.lane.b32.xlu0 %v337, 17
        %v349 = vpop.permute.xlu0 %348
        %350 = vrot.lane.b32.xlu0 %v338, 17
        %v351 = vpop.permute.xlu0 %350
        %vm352 = vcmask 138240
        %v353 = vsel %vm352, %v347, %v349
        %v354 = vsel %vm352, %v349, %v351
        %v357 = vsel %vm341, %v353, 0.0
        %v358 = vsel %vm342, %v354, 0.0
        %v359 = vsel %vm328, 1, 0
        %v360 = vsel %vm329, 1, 0
        %vm361 = vcmp.eq.s32.totalorder %v359, 1
        %vm362 = vcmp.eq.s32.totalorder %v360, 1
        %363 = vrot.lane.b32.xlu0 %v336, 15
        %v364 = vpop.permute.xlu0 %363
        %365 = vrot.lane.b32.xlu0 %v337, 15
        %v366 = vpop.permute.xlu0 %365
        %367 = vrot.lane.b32.xlu0 %v338, 15
        %v368 = vpop.permute.xlu0 %367
        %vm369 = vcmask 121856
        %v370 = vsel %vm369, %v364, %v366
        %v371 = vsel %vm369, %v366, %v368
        %v374 = vsel %vm361, %v370, 0.0
        %v375 = vsel %vm362, %v371, 0.0
        %376 = vrot.lane.b32.xlu0 %v336, 1
        %v377 = vpop.permute.xlu0 %376
        %378 = vrot.lane.b32.xlu0 %v337, 1
        %v379 = vpop.permute.xlu0 %378
        %380 = vrot.lane.b32.xlu0 %v338, 1
        %v381 = vpop.permute.xlu0 %380
        %vm382 = vcmask 7168
        %v383 = vsel %vm382, %v377, %v379
        %v384 = vsel %vm382, %v379, %v381
        %v387 = vsel %vm341, %v383, 0.0
        %v388 = vsel %vm342, %v384, 0.0
        %v389 = vld [vmem:[#allocation2 + $0x8] sm:$0xff]
        %v390 = vld [vmem:[#allocation2 + $0x10] sm:$0xff]
        %v391 = vld [vmem:[#allocation2 + $0x18] sm:$0xff]
        %395 = vrot.lane.b32.xlu0 %v389, 127
        %v396 = vpop.permute.xlu0 %395
        %397 = vrot.lane.b32.xlu0 %v390, 127
        %v398 = vpop.permute.xlu0 %397
        %399 = vrot.lane.b32.xlu0 %v391, 127
        %v400 = vpop.permute.xlu0 %399
        %vm401 = vcmask 1039360
        %v402 = vsel %vm401, %v396, %v398
        %v403 = vsel %vm401, %v398, %v400
        %v406 = vsel %vm361, %v402, 0.0
        %v407 = vsel %vm362, %v403, 0.0
        %408 = vrot.lane.b32.xlu0 %v389, 113
        %v409 = vpop.permute.xlu0 %408
        %410 = vrot.lane.b32.xlu0 %v390, 113
        %v411 = vpop.permute.xlu0 %410
        %412 = vrot.lane.b32.xlu0 %v391, 113
        %v413 = vpop.permute.xlu0 %412
        %vm414 = vcmask 924672
        %v415 = vsel %vm414, %v409, %v411
        %v416 = vsel %vm414, %v411, %v413
        %v419 = vsel %vm341, %v415, 0.0
        %v420 = vsel %vm342, %v416, 0.0
        %421 = vrot.lane.b32.xlu0 %v389, 111
        %v422 = vpop.permute.xlu0 %421
        %423 = vrot.lane.b32.xlu0 %v390, 111
        %v424 = vpop.permute.xlu0 %423
        %425 = vrot.lane.b32.xlu0 %v391, 111
        %v426 = vpop.permute.xlu0 %425
        %vm427 = vcmask 908288
        %v428 = vsel %vm427, %v422, %v424
        %v429 = vsel %vm427, %v424, %v426
        %v432 = vsel %vm361, %v428, 0.0
        %v433 = vsel %vm362, %v429, 0.0
        %434 = vrot.lane.b32.xlu0 %v336, 16
        %v435 = vpop.permute.xlu0 %434
        %436 = vrot.lane.b32.xlu0 %v337, 16
        %v437 = vpop.permute.xlu0 %436
        %438 = vrot.lane.b32.xlu0 %v338, 16
        %v439 = vpop.permute.xlu0 %438
        %vm440 = vcmask 130048
        %v441 = vsel %vm440, %v435, %v437
        %v442 = vsel %vm440, %v437, %v439
        %445 = vrot.lane.b32.xlu0 %v389, 112
        %v446 = vpop.permute.xlu0 %445
        %447 = vrot.lane.b32.xlu0 %v390, 112
        %v448 = vpop.permute.xlu0 %447
        %449 = vrot.lane.b32.xlu0 %v391, 112
        %v450 = vpop.permute.xlu0 %449
        %vm451 = vcmask 916480
        %v452 = vsel %vm451, %v446, %v448
        %v453 = vsel %vm451, %v448, %v450
        %vm456 = vcmask 588800
        %v458 = vsel %vm456, %v333, 0
        %460 = vmatprep.subr.mxu0 0.0
        %461 = vmatpush1.msra.mxu0 0.0
        %462 = vmatprep.subr.mxu0 0.0
        %463 = vmatpush1.msra.mxu0 0.0
        %464 = vmatprep.subr.mxu0 0.0
        %465 = vmatpush1.msra.mxu0 0.0
        %466 = vmatprep.subr.mxu0 0.0
        %467 = vmatpush1.msra.mxu0 0.0
        %468 = vmatprep.subr.mxu0 0.0
        %469 = vmatpush1.msra.mxu0 0.0
        %470 = vmatprep.subr.mxu0 0.0
        %471 = vmatpush1.msra.mxu0 0.0
        %472 = vmatprep.subr.mxu0 0.0
        %473 = vmatpush1.msra.mxu0 0.0
        %474 = vmatprep.subr.mxu0 %v433
        %475 = vmatpush1.msra.mxu0 %v432
        %476 = vmatprep.subr.mxu0 %v453
        %477 = vmatpush1.msra.mxu0 %v452
        %478 = vmatprep.subr.mxu0 %v420
        %479 = vmatpush1.msra.mxu0 %v419
        %480 = vmatprep.subr.mxu0 %v407
        %481 = vmatpush1.msra.mxu0 %v406
        %482 = vmatprep.subr.mxu0 %v338
        %483 = vmatpush1.msra.mxu0 %v337
        %484 = vmatprep.subr.mxu0 %v388
        %485 = vmatpush1.msra.mxu0 %v387
        %486 = vmatprep.subr.mxu0 %v375
        %487 = vmatpush1.msra.mxu0 %v374
        %488 = vmatprep.subr.mxu0 %v442
        %489 = vmatpush1.msra.mxu0 %v441
        %490 = vmatprep.subr.mxu0 %v358
        %491 = vmatpush1.msra.mxu0 %v357
        %492 = vmatprep.subr.mxu0 0.0
        %493 = vmatpush2.msra.mxu0 0.0
        %494 = vmatprep.subr.mxu0 0.0
        %495 = vmatpush2.msra.mxu0 0.0
        %496 = vmatprep.subr.mxu0 0.0
        %497 = vmatpush2.msra.mxu0 0.0
        %498 = vmatprep.subr.mxu0 0.0
        %499 = vmatpush2.msra.mxu0 0.0
        %500 = vmatprep.subr.mxu0 0.0
        %501 = vmatpush2.msra.mxu0 0.0
        %502 = vmatprep.subr.mxu0 0.0
        %503 = vmatpush2.msra.mxu0 0.0
        %504 = vmatprep.subr.mxu0 0.0
        %505 = vmatpush2.msra.mxu0 0.0
        %506 = vmatprep.subr.mxu0 0.0
        %507 = vmatpush2.msra.mxu0 0.0
        %508 = vmatprep.subr.mxu0 0.0
        %509 = vmatpush2.msra.mxu0 0.0
        %510 = vmatprep.subr.mxu0 0.0
        %511 = vmatpush2.msra.mxu0 0.0
        %512 = vmatprep.subr.mxu0 0.0
        %513 = vmatpush2.msra.mxu0 0.0
        %514 = vmatprep.subr.mxu0 0.0
        %515 = vmatpush2.msra.mxu0 0.0
        %516 = vmatprep.subr.mxu0 0.0
        %517 = vmatpush2.msra.mxu0 0.0
        %518 = vmatprep.subr.mxu0 0.0
        %519 = vmatpush2.msra.mxu0 0.0
        %520 = vmatprep.subr.mxu0 0.0
        %521 = vmatpush2.msra.mxu0 0.0
        %522 = vmatprep.subr.mxu0 0.0
        %523 = vmatpush2.msra.mxu0 0.0
        %524 = vmatprep.mubr.f32.mxu0 0.0
        %525 = vmatmul.mubr.f32.gmra.mxu0 %v458
        %v526 = vpop.f32.mrf.mxu0
        %v527 = vadd.f32 0.0, %v526
        %v528 = vpop.f32.mrf.mxu0
        %v529 = vadd.f32 0.0, %v528
        %530 = vdwg.mxu0
        %v531 = vld [vmem:[%s4] sm:$0xff]
        %v532 = vld [vmem:[%s5] sm:$0xff]
        %v533 = vadd.f32 %v527, %v529
        %534 = vadd.xlane.f32.xlu0 %v533
        %v535 = vpop.xlane.xlu0 %534
        %vm536 = vcmask 64512
        %v538 = vsel %vm536, %v330, 0
        %540 = vmatprep.subr.mxu0 0.0
        %541 = vmatpush1.msra.mxu0 0.0
        %542 = vmatprep.subr.mxu0 0.0
        %543 = vmatpush1.msra.mxu0 0.0
        %544 = vmatprep.subr.mxu0 0.0
        %545 = vmatpush1.msra.mxu0 0.0
        %546 = vmatprep.subr.mxu0 0.0
        %547 = vmatpush1.msra.mxu0 0.0
        %548 = vmatprep.subr.mxu0 0.0
        %549 = vmatpush1.msra.mxu0 0.0
        %550 = vmatprep.subr.mxu0 0.0
        %551 = vmatpush1.msra.mxu0 0.0
        %552 = vmatprep.subr.mxu0 0.0
        %553 = vmatpush1.msra.mxu0 0.0
        %554 = vmatprep.subr.mxu0 0.0
        %555 = vmatpush1.msra.mxu0 0.0
        %556 = vmatprep.subr.mxu0 0.0
        %557 = vmatpush1.msra.mxu0 0.0
        %558 = vmatprep.subr.mxu0 0.0
        %559 = vmatpush1.msra.mxu0 0.0
        %560 = vmatprep.subr.mxu0 0.0
        %561 = vmatpush1.msra.mxu0 0.0
        %562 = vmatprep.subr.mxu0 0.0
        %563 = vmatpush1.msra.mxu0 0.0
        %564 = vmatprep.subr.mxu0 0.0
        %565 = vmatpush1.msra.mxu0 0.0
        %566 = vmatprep.subr.mxu0 0.0
        %567 = vmatpush1.msra.mxu0 0.0
        %568 = vmatprep.subr.mxu0 0.0
        %569 = vmatpush1.msra.mxu0 0.0
        %570 = vmatprep.subr.mxu0 0.0
        %571 = vmatpush1.msra.mxu0 %v535
        %572 = vmatprep.subr.mxu0 0.0
        %573 = vmatpush2.msra.mxu0 0.0
        %574 = vmatprep.subr.mxu0 0.0
        %575 = vmatpush2.msra.mxu0 0.0
        %576 = vmatprep.subr.mxu0 0.0
        %577 = vmatpush2.msra.mxu0 0.0
        %578 = vmatprep.subr.mxu0 0.0
        %579 = vmatpush2.msra.mxu0 0.0
        %580 = vmatprep.subr.mxu0 0.0
        %581 = vmatpush2.msra.mxu0 0.0
        %582 = vmatprep.subr.mxu0 0.0
        %583 = vmatpush2.msra.mxu0 0.0
        %584 = vmatprep.subr.mxu0 0.0
        %585 = vmatpush2.msra.mxu0 0.0
        %586 = vmatprep.subr.mxu0 0.0
        %587 = vmatpush2.msra.mxu0 0.0
        %588 = vmatprep.subr.mxu0 0.0
        %589 = vmatpush2.msra.mxu0 0.0
        %590 = vmatprep.subr.mxu0 0.0
        %591 = vmatpush2.msra.mxu0 0.0
        %592 = vmatprep.subr.mxu0 0.0
        %593 = vmatpush2.msra.mxu0 0.0
        %594 = vmatprep.subr.mxu0 0.0
        %595 = vmatpush2.msra.mxu0 0.0
        %596 = vmatprep.subr.mxu0 0.0
        %597 = vmatpush2.msra.mxu0 0.0
        %598 = vmatprep.subr.mxu0 0.0
        %599 = vmatpush2.msra.mxu0 0.0
        %600 = vmatprep.subr.mxu0 0.0
        %601 = vmatpush2.msra.mxu0 0.0
        %602 = vmatprep.subr.mxu0 0.0
        %603 = vmatpush2.msra.mxu0 0.0
        %604 = vmatprep.mubr.f32.mxu0 0.0
        %605 = vmatmul.mubr.f32.gmra.mxu0 %v538
        %v606 = vpop.f32.mrf.mxu0
        %v607 = vadd.f32 0.0, %v606
        %v608 = vpop.f32.mrf.mxu0
        %609 = vdwg.mxu0
        %611 = vset.pattern.permute.xlu0 0
        %612 = vperm.xlu0 %611, %v607
        %v613 = vpop.permute.xlu0 %612
        %v615 = vsub.f32 %v527, %v613
        %v616 = vsub.f32 %v529, %v613
        %v617 = vmul.f32 %v615, %v615
        %v618 = vmul.f32 %v616, %v616
        %v619 = vadd.f32 %v617, %v618
        %620 = vadd.xlane.f32.xlu0 %v619
        %v621 = vpop.xlane.xlu0 %620
        %622 = vmatprep.subr.mxu0 0.0
        %623 = vmatpush1.msra.mxu0 0.0
        %624 = vmatprep.subr.mxu0 0.0
        %625 = vmatpush1.msra.mxu0 0.0
        %626 = vmatprep.subr.mxu0 0.0
        %627 = vmatpush1.msra.mxu0 0.0
        %628 = vmatprep.subr.mxu0 0.0
        %629 = vmatpush1.msra.mxu0 0.0
        %630 = vmatprep.subr.mxu0 0.0
        %631 = vmatpush1.msra.mxu0 0.0
        %632 = vmatprep.subr.mxu0 0.0
        %633 = vmatpush1.msra.mxu0 0.0
        %634 = vmatprep.subr.mxu0 0.0
        %635 = vmatpush1.msra.mxu0 0.0
        %636 = vmatprep.subr.mxu0 0.0
        %637 = vmatpush1.msra.mxu0 0.0
        %638 = vmatprep.subr.mxu0 0.0
        %639 = vmatpush1.msra.mxu0 0.0
        %640 = vmatprep.subr.mxu0 0.0
        %641 = vmatpush1.msra.mxu0 0.0
        %642 = vmatprep.subr.mxu0 0.0
        %643 = vmatpush1.msra.mxu0 0.0
        %644 = vmatprep.subr.mxu0 0.0
        %645 = vmatpush1.msra.mxu0 0.0
        %646 = vmatprep.subr.mxu0 0.0
        %647 = vmatpush1.msra.mxu0 0.0
        %648 = vmatprep.subr.mxu0 0.0
        %649 = vmatpush1.msra.mxu0 0.0
        %650 = vmatprep.subr.mxu0 0.0
        %651 = vmatpush1.msra.mxu0 0.0
        %652 = vmatprep.subr.mxu0 0.0
        %653 = vmatpush1.msra.mxu0 %v621
        %654 = vmatprep.subr.mxu0 0.0
        %655 = vmatpush2.msra.mxu0 0.0
        %656 = vmatprep.subr.mxu0 0.0
        %657 = vmatpush2.msra.mxu0 0.0
        %658 = vmatprep.subr.mxu0 0.0
        %659 = vmatpush2.msra.mxu0 0.0
        %660 = vmatprep.subr.mxu0 0.0
        %661 = vmatpush2.msra.mxu0 0.0
        %662 = vmatprep.subr.mxu0 0.0
        %663 = vmatpush2.msra.mxu0 0.0
        %664 = vmatprep.subr.mxu0 0.0
        %665 = vmatpush2.msra.mxu0 0.0
        %666 = vmatprep.subr.mxu0 0.0
        %667 = vmatpush2.msra.mxu0 0.0
        %668 = vmatprep.subr.mxu0 0.0
        %669 = vmatpush2.msra.mxu0 0.0
        %670 = vmatprep.subr.mxu0 0.0
        %671 = vmatpush2.msra.mxu0 0.0
        %672 = vmatprep.subr.mxu0 0.0
        %673 = vmatpush2.msra.mxu0 0.0
        %674 = vmatprep.subr.mxu0 0.0
        %675 = vmatpush2.msra.mxu0 0.0
        %676 = vmatprep.subr.mxu0 0.0
        %677 = vmatpush2.msra.mxu0 0.0
        %678 = vmatprep.subr.mxu0 0.0
        %679 = vmatpush2.msra.mxu0 0.0
        %680 = vmatprep.subr.mxu0 0.0
        %681 = vmatpush2.msra.mxu0 0.0
        %682 = vmatprep.subr.mxu0 0.0
        %683 = vmatpush2.msra.mxu0 0.0
        %684 = vmatprep.subr.mxu0 0.0
        %685 = vmatpush2.msra.mxu0 0.0
        %686 = vmatprep.mubr.f32.mxu0 0.0
        %687 = vmatmul.mubr.f32.gmra.mxu0 %v538
        %v688 = vpop.f32.mrf.mxu0
        %v689 = vadd.f32 1e-05, %v688
        %v690 = vpop.f32.mrf.mxu0
        %691 = vdwg.mxu0
        %v692 = vrsqrt.pop %v689
        %v693 = vmul.f32 %v692, %v531
        %695 = vset.pattern.permute.xlu0 0
        %696 = vperm.xlu0 %695, %v693
        %v697 = vpop.permute.xlu0 %696
        %v699 = vmul.f32 %v615, %v697
        %v700 = vmul.f32 %v616, %v697
        %702 = vset.pattern.permute.xlu0 0
        %703 = vperm.xlu0 %702, %v532
        %v704 = vpop.permute.xlu0 %703
        %v706 = vadd.f32 %v699, %v704
        %v707 = vadd.f32 %v700, %v704
        %v708 = vmax.f32 %v706, 0.0
        %v709 = vmax.f32 %v707, 0.0
        %v710 = vld [vmem:[%s3] sm:$0xff]
        %711 = vst [vmem:[#allocation2 + $0x8] sm:$0xff] %v708
        %712 = vst [vmem:[#allocation2 + $0x10] sm:$0xff] %v709
        %v713 = vld [vmem:[#allocation2] sm:$0xff]
        %v714 = vld [vmem:[#allocation2 + $0x8] sm:$0xff]
        %v715 = vld [vmem:[#allocation2 + $0x10] sm:$0xff]
        %719 = vrot.lane.b32.xlu0 %v713, 17
        %v720 = vpop.permute.xlu0 %719
        %721 = vrot.lane.b32.xlu0 %v714, 17
        %v722 = vpop.permute.xlu0 %721
        %723 = vrot.lane.b32.xlu0 %v715, 17
        %v724 = vpop.permute.xlu0 %723
        %v725 = vsel %vm352, %v720, %v722
        %v726 = vsel %vm352, %v722, %v724
        %v729 = vsel %vm341, %v725, 0.0
        %v730 = vsel %vm342, %v726, 0.0
        %731 = vrot.lane.b32.xlu0 %v713, 15
        %v732 = vpop.permute.xlu0 %731
        %733 = vrot.lane.b32.xlu0 %v714, 15
        %v734 = vpop.permute.xlu0 %733
        %735 = vrot.lane.b32.xlu0 %v715, 15
        %v736 = vpop.permute.xlu0 %735
        %v737 = vsel %vm369, %v732, %v734
        %v738 = vsel %vm369, %v734, %v736
        %v741 = vsel %vm361, %v737, 0.0
        %v742 = vsel %vm362, %v738, 0.0
        %743 = vrot.lane.b32.xlu0 %v713, 1
        %v744 = vpop.permute.xlu0 %743
        %745 = vrot.lane.b32.xlu0 %v714, 1
        %v746 = vpop.permute.xlu0 %745
        %747 = vrot.lane.b32.xlu0 %v715, 1
        %v748 = vpop.permute.xlu0 %747
        %v749 = vsel %vm382, %v744, %v746
        %v750 = vsel %vm382, %v746, %v748
        %v753 = vsel %vm341, %v749, 0.0
        %v754 = vsel %vm342, %v750, 0.0
        %v755 = vld [vmem:[#allocation2 + $0x8] sm:$0xff]
        %v756 = vld [vmem:[#allocation2 + $0x10] sm:$0xff]
        %v757 = vld [vmem:[#allocation2 + $0x18] sm:$0xff]
        %761 = vrot.lane.b32.xlu0 %v755, 127
        %v762 = vpop.permute.xlu0 %761
        %763 = vrot.lane.b32.xlu0 %v756, 127
        %v764 = vpop.permute.xlu0 %763
        %765 = vrot.lane.b32.xlu0 %v757, 127
        %v766 = vpop.permute.xlu0 %765
        %v767 = vsel %vm401, %v762, %v764
        %v768 = vsel %vm401, %v764, %v766
        %v771 = vsel %vm361, %v767, 0.0
        %v772 = vsel %vm362, %v768, 0.0
        %773 = vrot.lane.b32.xlu0 %v755, 113
        %v774 = vpop.permute.xlu0 %773
        %775 = vrot.lane.b32.xlu0 %v756, 113
        %v776 = vpop.permute.xlu0 %775
        %777 = vrot.lane.b32.xlu0 %v757, 113
        %v778 = vpop.permute.xlu0 %777
        %v779 = vsel %vm414, %v774, %v776
        %v780 = vsel %vm414, %v776, %v778
        %v783 = vsel %vm341, %v779, 0.0
        %v784 = vsel %vm342, %v780, 0.0
        %785 = vrot.lane.b32.xlu0 %v755, 111
        %v786 = vpop.permute.xlu0 %785
        %787 = vrot.lane.b32.xlu0 %v756, 111
        %v788 = vpop.permute.xlu0 %787
        %789 = vrot.lane.b32.xlu0 %v757, 111
        %v790 = vpop.permute.xlu0 %789
        %v791 = vsel %vm427, %v786, %v788
        %v792 = vsel %vm427, %v788, %v790
        %v795 = vsel %vm361, %v791, 0.0
        %v796 = vsel %vm362, %v792, 0.0
        %797 = vrot.lane.b32.xlu0 %v713, 16
        %v798 = vpop.permute.xlu0 %797
        %799 = vrot.lane.b32.xlu0 %v714, 16
        %v800 = vpop.permute.xlu0 %799
        %801 = vrot.lane.b32.xlu0 %v715, 16
        %v802 = vpop.permute.xlu0 %801
        %v803 = vsel %vm440, %v798, %v800
        %v804 = vsel %vm440, %v800, %v802
        %807 = vrot.lane.b32.xlu0 %v755, 112
        %v808 = vpop.permute.xlu0 %807
        %809 = vrot.lane.b32.xlu0 %v756, 112
        %v810 = vpop.permute.xlu0 %809
        %811 = vrot.lane.b32.xlu0 %v757, 112
        %v812 = vpop.permute.xlu0 %811
        %v813 = vsel %vm451, %v808, %v810
        %v814 = vsel %vm451, %v810, %v812
        %v817 = vld [vmem:[%s296] sm:$0xff]
        %v818 = vld [vmem:[%s296 + $0x8] sm:$0xff]
        %v820 = vsel %vm456, %v710, 0
        %822 = vmatprep.subr.mxu0 0.0
        %823 = vmatpush1.msra.mxu0 0.0
        %824 = vmatprep.subr.mxu0 0.0
        %825 = vmatpush1.msra.mxu0 0.0
        %826 = vmatprep.subr.mxu0 0.0
        %827 = vmatpush1.msra.mxu0 0.0
        %828 = vmatprep.subr.mxu0 0.0
        %829 = vmatpush1.msra.mxu0 0.0
        %830 = vmatprep.subr.mxu0 0.0
        %831 = vmatpush1.msra.mxu0 0.0
        %832 = vmatprep.subr.mxu0 0.0
        %833 = vmatpush1.msra.mxu0 0.0
        %834 = vmatprep.subr.mxu0 0.0
        %835 = vmatpush1.msra.mxu0 0.0
        %836 = vmatprep.subr.mxu0 %v796
        %837 = vmatpush1.msra.mxu0 %v795
        %838 = vmatprep.subr.mxu0 %v814
        %839 = vmatpush1.msra.mxu0 %v813
        %840 = vmatprep.subr.mxu0 %v784
        %841 = vmatpush1.msra.mxu0 %v783
        %842 = vmatprep.subr.mxu0 %v772
        %843 = vmatpush1.msra.mxu0 %v771
        %844 = vmatprep.subr.mxu0 %v715
        %845 = vmatpush1.msra.mxu0 %v714
        %846 = vmatprep.subr.mxu0 %v754
        %847 = vmatpush1.msra.mxu0 %v753
        %848 = vmatprep.subr.mxu0 %v742
        %849 = vmatpush1.msra.mxu0 %v741
        %850 = vmatprep.subr.mxu0 %v804
        %851 = vmatpush1.msra.mxu0 %v803
        %852 = vmatprep.subr.mxu0 %v730
        %853 = vmatpush1.msra.mxu0 %v729
        %854 = vmatprep.subr.mxu0 0.0
        %855 = vmatpush2.msra.mxu0 0.0
        %856 = vmatprep.subr.mxu0 0.0
        %857 = vmatpush2.msra.mxu0 0.0
        %858 = vmatprep.subr.mxu0 0.0
        %859 = vmatpush2.msra.mxu0 0.0
        %860 = vmatprep.subr.mxu0 0.0
        %861 = vmatpush2.msra.mxu0 0.0
        %862 = vmatprep.subr.mxu0 0.0
        %863 = vmatpush2.msra.mxu0 0.0
        %864 = vmatprep.subr.mxu0 0.0
        %865 = vmatpush2.msra.mxu0 0.0
        %866 = vmatprep.subr.mxu0 0.0
        %867 = vmatpush2.msra.mxu0 0.0
        %868 = vmatprep.subr.mxu0 0.0
        %869 = vmatpush2.msra.mxu0 0.0
        %870 = vmatprep.subr.mxu0 0.0
        %871 = vmatpush2.msra.mxu0 0.0
        %872 = vmatprep.subr.mxu0 0.0
        %873 = vmatpush2.msra.mxu0 0.0
        %874 = vmatprep.subr.mxu0 0.0
        %875 = vmatpush2.msra.mxu0 0.0
        %876 = vmatprep.subr.mxu0 0.0
        %877 = vmatpush2.msra.mxu0 0.0
        %878 = vmatprep.subr.mxu0 0.0
        %879 = vmatpush2.msra.mxu0 0.0
        %880 = vmatprep.subr.mxu0 0.0
        %881 = vmatpush2.msra.mxu0 0.0
        %882 = vmatprep.subr.mxu0 0.0
        %883 = vmatpush2.msra.mxu0 0.0
        %884 = vmatprep.subr.mxu0 0.0
        %885 = vmatpush2.msra.mxu0 0.0
        %886 = vmatprep.mubr.f32.mxu0 0.0
        %887 = vmatmul.mubr.f32.gmra.mxu0 %v820
        %v888 = vpop.f32.mrf.mxu0
        %v889 = vadd.f32 %v817, %v888
        %v890 = vpop.f32.mrf.mxu0
        %v891 = vadd.f32 %v818, %v890
        %892 = vdwg.mxu0
        %s893 = scalar_lea.vmem %s4, 8
        %v894 = vld [vmem:[%s893] sm:$0xff]
        %s895 = scalar_lea.vmem %s5, 8
        %v896 = vld [vmem:[%s895] sm:$0xff]
        %v897 = vadd.f32 %v889, %v891
        %898 = vadd.xlane.f32.xlu0 %v897
        %v899 = vpop.xlane.xlu0 %898
        %900 = vmatprep.subr.mxu0 0.0
        %901 = vmatpush1.msra.mxu0 0.0
        %902 = vmatprep.subr.mxu0 0.0
        %903 = vmatpush1.msra.mxu0 0.0
        %904 = vmatprep.subr.mxu0 0.0
        %905 = vmatpush1.msra.mxu0 0.0
        %906 = vmatprep.subr.mxu0 0.0
        %907 = vmatpush1.msra.mxu0 0.0
        %908 = vmatprep.subr.mxu0 0.0
        %909 = vmatpush1.msra.mxu0 0.0
        %910 = vmatprep.subr.mxu0 0.0
        %911 = vmatpush1.msra.mxu0 0.0
        %912 = vmatprep.subr.mxu0 0.0
        %913 = vmatpush1.msra.mxu0 0.0
        %914 = vmatprep.subr.mxu0 0.0
        %915 = vmatpush1.msra.mxu0 0.0
        %916 = vmatprep.subr.mxu0 0.0
        %917 = vmatpush1.msra.mxu0 0.0
        %918 = vmatprep.subr.mxu0 0.0
        %919 = vmatpush1.msra.mxu0 0.0
        %920 = vmatprep.subr.mxu0 0.0
        %921 = vmatpush1.msra.mxu0 0.0
        %922 = vmatprep.subr.mxu0 0.0
        %923 = vmatpush1.msra.mxu0 0.0
        %924 = vmatprep.subr.mxu0 0.0
        %925 = vmatpush1.msra.mxu0 0.0
        %926 = vmatprep.subr.mxu0 0.0
        %927 = vmatpush1.msra.mxu0 0.0
        %928 = vmatprep.subr.mxu0 0.0
        %929 = vmatpush1.msra.mxu0 0.0
        %930 = vmatprep.subr.mxu0 0.0
        %931 = vmatpush1.msra.mxu0 %v899
        %932 = vmatprep.subr.mxu0 0.0
        %933 = vmatpush2.msra.mxu0 0.0
        %934 = vmatprep.subr.mxu0 0.0
        %935 = vmatpush2.msra.mxu0 0.0
        %936 = vmatprep.subr.mxu0 0.0
        %937 = vmatpush2.msra.mxu0 0.0
        %938 = vmatprep.subr.mxu0 0.0
        %939 = vmatpush2.msra.mxu0 0.0
        %940 = vmatprep.subr.mxu0 0.0
        %941 = vmatpush2.msra.mxu0 0.0
        %942 = vmatprep.subr.mxu0 0.0
        %943 = vmatpush2.msra.mxu0 0.0
        %944 = vmatprep.subr.mxu0 0.0
        %945 = vmatpush2.msra.mxu0 0.0
        %946 = vmatprep.subr.mxu0 0.0
        %947 = vmatpush2.msra.mxu0 0.0
        %948 = vmatprep.subr.mxu0 0.0
        %949 = vmatpush2.msra.mxu0 0.0
        %950 = vmatprep.subr.mxu0 0.0
        %951 = vmatpush2.msra.mxu0 0.0
        %952 = vmatprep.subr.mxu0 0.0
        %953 = vmatpush2.msra.mxu0 0.0
        %954 = vmatprep.subr.mxu0 0.0
        %955 = vmatpush2.msra.mxu0 0.0
        %956 = vmatprep.subr.mxu0 0.0
        %957 = vmatpush2.msra.mxu0 0.0
        %958 = vmatprep.subr.mxu0 0.0
        %959 = vmatpush2.msra.mxu0 0.0
        %960 = vmatprep.subr.mxu0 0.0
        %961 = vmatpush2.msra.mxu0 0.0
        %962 = vmatprep.subr.mxu0 0.0
        %963 = vmatpush2.msra.mxu0 0.0
        %964 = vmatprep.mubr.f32.mxu0 0.0
        %965 = vmatmul.mubr.f32.gmra.mxu0 %v538
        %v966 = vpop.f32.mrf.mxu0
        %v967 = vadd.f32 0.0, %v966
        %v968 = vpop.f32.mrf.mxu0
        %969 = vdwg.mxu0
        %971 = vset.pattern.permute.xlu0 0
        %972 = vperm.xlu0 %971, %v967
        %v973 = vpop.permute.xlu0 %972
        %v975 = vsub.f32 %v889, %v973
        %v976 = vsub.f32 %v891, %v973
        %v977 = vmul.f32 %v975, %v975
        %v978 = vmul.f32 %v976, %v976
        %v979 = vadd.f32 %v977, %v978
        %980 = vadd.xlane.f32.xlu0 %v979
        %v981 = vpop.xlane.xlu0 %980
        %982 = vmatprep.subr.mxu0 0.0
        %983 = vmatpush1.msra.mxu0 0.0
        %984 = vmatprep.subr.mxu0 0.0
        %985 = vmatpush1.msra.mxu0 0.0
        %986 = vmatprep.subr.mxu0 0.0
        %987 = vmatpush1.msra.mxu0 0.0
        %988 = vmatprep.subr.mxu0 0.0
        %989 = vmatpush1.msra.mxu0 0.0
        %990 = vmatprep.subr.mxu0 0.0
        %991 = vmatpush1.msra.mxu0 0.0
        %992 = vmatprep.subr.mxu0 0.0
        %993 = vmatpush1.msra.mxu0 0.0
        %994 = vmatprep.subr.mxu0 0.0
        %995 = vmatpush1.msra.mxu0 0.0
        %996 = vmatprep.subr.mxu0 0.0
        %997 = vmatpush1.msra.mxu0 0.0
        %998 = vmatprep.subr.mxu0 0.0
        %999 = vmatpush1.msra.mxu0 0.0
        %1000 = vmatprep.subr.mxu0 0.0
        %1001 = vmatpush1.msra.mxu0 0.0
        %1002 = vmatprep.subr.mxu0 0.0
        %1003 = vmatpush1.msra.mxu0 0.0
        %1004 = vmatprep.subr.mxu0 0.0
        %1005 = vmatpush1.msra.mxu0 0.0
        %1006 = vmatprep.subr.mxu0 0.0
        %1007 = vmatpush1.msra.mxu0 0.0
        %1008 = vmatprep.subr.mxu0 0.0
        %1009 = vmatpush1.msra.mxu0 0.0
        %1010 = vmatprep.subr.mxu0 0.0
        %1011 = vmatpush1.msra.mxu0 0.0
        %1012 = vmatprep.subr.mxu0 0.0
        %1013 = vmatpush1.msra.mxu0 %v981
        %1014 = vmatprep.subr.mxu0 0.0
        %1015 = vmatpush2.msra.mxu0 0.0
        %1016 = vmatprep.subr.mxu0 0.0
        %1017 = vmatpush2.msra.mxu0 0.0
        %1018 = vmatprep.subr.mxu0 0.0
        %1019 = vmatpush2.msra.mxu0 0.0
        %1020 = vmatprep.subr.mxu0 0.0
        %1021 = vmatpush2.msra.mxu0 0.0
        %1022 = vmatprep.subr.mxu0 0.0
        %1023 = vmatpush2.msra.mxu0 0.0
        %1024 = vmatprep.subr.mxu0 0.0
        %1025 = vmatpush2.msra.mxu0 0.0
        %1026 = vmatprep.subr.mxu0 0.0
        %1027 = vmatpush2.msra.mxu0 0.0
        %1028 = vmatprep.subr.mxu0 0.0
        %1029 = vmatpush2.msra.mxu0 0.0
        %1030 = vmatprep.subr.mxu0 0.0
        %1031 = vmatpush2.msra.mxu0 0.0
        %1032 = vmatprep.subr.mxu0 0.0
        %1033 = vmatpush2.msra.mxu0 0.0
        %1034 = vmatprep.subr.mxu0 0.0
        %1035 = vmatpush2.msra.mxu0 0.0
        %1036 = vmatprep.subr.mxu0 0.0
        %1037 = vmatpush2.msra.mxu0 0.0
        %1038 = vmatprep.subr.mxu0 0.0
        %1039 = vmatpush2.msra.mxu0 0.0
        %1040 = vmatprep.subr.mxu0 0.0
        %1041 = vmatpush2.msra.mxu0 0.0
        %1042 = vmatprep.subr.mxu0 0.0
        %1043 = vmatpush2.msra.mxu0 0.0
        %1044 = vmatprep.subr.mxu0 0.0
        %1045 = vmatpush2.msra.mxu0 0.0
        %1046 = vmatprep.mubr.f32.mxu0 0.0
        %1047 = vmatmul.mubr.f32.gmra.mxu0 %v538
        %v1048 = vpop.f32.mrf.mxu0
        %v1049 = vadd.f32 1e-05, %v1048
        %v1050 = vpop.f32.mrf.mxu0
        %1051 = vdwg.mxu0
        %v1052 = vrsqrt.pop %v1049
        %v1053 = vmul.f32 %v1052, %v894
        %1055 = vset.pattern.permute.xlu0 0
        %1056 = vperm.xlu0 %1055, %v1053
        %v1057 = vpop.permute.xlu0 %1056
        %v1059 = vmul.f32 %v975, %v1057
        %v1060 = vmul.f32 %v976, %v1057
        %1062 = vset.pattern.permute.xlu0 0
        %1063 = vperm.xlu0 %1062, %v896
        %v1064 = vpop.permute.xlu0 %1063
        %v1066 = vadd.f32 %v1059, %v1064
        %v1067 = vadd.f32 %v1060, %v1064
        %v1068 = vadd.f32 %v1066, %v331
        %v1069 = vadd.f32 %v1067, %v332
        %v1070 = vmax.f32 %v1068, 0.0
        %v1071 = vmax.f32 %v1069, 0.0
        %s1072 = scalar_lea.vmem %s4, 16
        %v1073 = vld [vmem:[%s1072] sm:$0xff]
        %s1074 = scalar_lea.vmem %s5, 16
        %v1075 = vld [vmem:[%s1074] sm:$0xff]
        %v1076 = vadd.f32 %v1070, %v1071
        %1077 = vadd.xlane.f32.xlu0 %v1076
        %v1078 = vpop.xlane.xlu0 %1077
        %1079 = vmatprep.subr.mxu0 0.0
        %1080 = vmatpush1.msra.mxu0 0.0
        %1081 = vmatprep.subr.mxu0 0.0
        %1082 = vmatpush1.msra.mxu0 0.0
        %1083 = vmatprep.subr.mxu0 0.0
        %1084 = vmatpush1.msra.mxu0 0.0
        %1085 = vmatprep.subr.mxu0 0.0
        %1086 = vmatpush1.msra.mxu0 0.0
        %1087 = vmatprep.subr.mxu0 0.0
        %1088 = vmatpush1.msra.mxu0 0.0
        %1089 = vmatprep.subr.mxu0 0.0
        %1090 = vmatpush1.msra.mxu0 0.0
        %1091 = vmatprep.subr.mxu0 0.0
        %1092 = vmatpush1.msra.mxu0 0.0
        %1093 = vmatprep.subr.mxu0 0.0
        %1094 = vmatpush1.msra.mxu0 0.0
        %1095 = vmatprep.subr.mxu0 0.0
        %1096 = vmatpush1.msra.mxu0 0.0
        %1097 = vmatprep.subr.mxu0 0.0
        %1098 = vmatpush1.msra.mxu0 0.0
        %1099 = vmatprep.subr.mxu0 0.0
        %1100 = vmatpush1.msra.mxu0 0.0
        %1101 = vmatprep.subr.mxu0 0.0
        %1102 = vmatpush1.msra.mxu0 0.0
        %1103 = vmatprep.subr.mxu0 0.0
        %1104 = vmatpush1.msra.mxu0 0.0
        %1105 = vmatprep.subr.mxu0 0.0
        %1106 = vmatpush1.msra.mxu0 0.0
        %1107 = vmatprep.subr.mxu0 0.0
        %1108 = vmatpush1.msra.mxu0 0.0
        %1109 = vmatprep.subr.mxu0 0.0
        %1110 = vmatpush1.msra.mxu0 %v1078
        %1111 = vmatprep.subr.mxu0 0.0
        %1112 = vmatpush2.msra.mxu0 0.0
        %1113 = vmatprep.subr.mxu0 0.0
        %1114 = vmatpush2.msra.mxu0 0.0
        %1115 = vmatprep.subr.mxu0 0.0
        %1116 = vmatpush2.msra.mxu0 0.0
        %1117 = vmatprep.subr.mxu0 0.0
        %1118 = vmatpush2.msra.mxu0 0.0
        %1119 = vmatprep.subr.mxu0 0.0
        %1120 = vmatpush2.msra.mxu0 0.0
        %1121 = vmatprep.subr.mxu0 0.0
        %1122 = vmatpush2.msra.mxu0 0.0
        %1123 = vmatprep.subr.mxu0 0.0
        %1124 = vmatpush2.msra.mxu0 0.0
        %1125 = vmatprep.subr.mxu0 0.0
        %1126 = vmatpush2.msra.mxu0 0.0
        %1127 = vmatprep.subr.mxu0 0.0
        %1128 = vmatpush2.msra.mxu0 0.0
        %1129 = vmatprep.subr.mxu0 0.0
        %1130 = vmatpush2.msra.mxu0 0.0
        %1131 = vmatprep.subr.mxu0 0.0
        %1132 = vmatpush2.msra.mxu0 0.0
        %1133 = vmatprep.subr.mxu0 0.0
        %1134 = vmatpush2.msra.mxu0 0.0
        %1135 = vmatprep.subr.mxu0 0.0
        %1136 = vmatpush2.msra.mxu0 0.0
        %1137 = vmatprep.subr.mxu0 0.0
        %1138 = vmatpush2.msra.mxu0 0.0
        %1139 = vmatprep.subr.mxu0 0.0
        %1140 = vmatpush2.msra.mxu0 0.0
        %1141 = vmatprep.subr.mxu0 0.0
        %1142 = vmatpush2.msra.mxu0 0.0
        %1143 = vmatprep.mubr.f32.mxu0 0.0
        %1144 = vmatmul.mubr.f32.gmra.mxu0 %v538
        %v1145 = vpop.f32.mrf.mxu0
        %v1146 = vadd.f32 0.0, %v1145
        %v1147 = vpop.f32.mrf.mxu0
        %1148 = vdwg.mxu0
        %1150 = vset.pattern.permute.xlu0 0
        %1151 = vperm.xlu0 %1150, %v1146
        %v1152 = vpop.permute.xlu0 %1151
        %v1154 = vsub.f32 %v1070, %v1152
        %v1155 = vsub.f32 %v1071, %v1152
        %v1156 = vmul.f32 %v1154, %v1154
        %v1157 = vmul.f32 %v1155, %v1155
        %v1158 = vadd.f32 %v1156, %v1157
        %1159 = vadd.xlane.f32.xlu0 %v1158
        %v1160 = vpop.xlane.xlu0 %1159
        %1161 = vmatprep.subr.mxu0 0.0
        %1162 = vmatpush1.msra.mxu0 0.0
        %1163 = vmatprep.subr.mxu0 0.0
        %1164 = vmatpush1.msra.mxu0 0.0
        %1165 = vmatprep.subr.mxu0 0.0
        %1166 = vmatpush1.msra.mxu0 0.0
        %1167 = vmatprep.subr.mxu0 0.0
        %1168 = vmatpush1.msra.mxu0 0.0
        %1169 = vmatprep.subr.mxu0 0.0
        %1170 = vmatpush1.msra.mxu0 0.0
        %1171 = vmatprep.subr.mxu0 0.0
        %1172 = vmatpush1.msra.mxu0 0.0
        %1173 = vmatprep.subr.mxu0 0.0
        %1174 = vmatpush1.msra.mxu0 0.0
        %1175 = vmatprep.subr.mxu0 0.0
        %1176 = vmatpush1.msra.mxu0 0.0
        %1177 = vmatprep.subr.mxu0 0.0
        %1178 = vmatpush1.msra.mxu0 0.0
        %1179 = vmatprep.subr.mxu0 0.0
        %1180 = vmatpush1.msra.mxu0 0.0
        %1181 = vmatprep.subr.mxu0 0.0
        %1182 = vmatpush1.msra.mxu0 0.0
        %1183 = vmatprep.subr.mxu0 0.0
        %1184 = vmatpush1.msra.mxu0 0.0
        %1185 = vmatprep.subr.mxu0 0.0
        %1186 = vmatpush1.msra.mxu0 0.0
        %1187 = vmatprep.subr.mxu0 0.0
        %1188 = vmatpush1.msra.mxu0 0.0
        %1189 = vmatprep.subr.mxu0 0.0
        %1190 = vmatpush1.msra.mxu0 0.0
        %1191 = vmatprep.subr.mxu0 0.0
        %1192 = vmatpush1.msra.mxu0 %v1160
        %1193 = vmatprep.subr.mxu0 0.0
        %1194 = vmatpush2.msra.mxu0 0.0
        %1195 = vmatprep.subr.mxu0 0.0
        %1196 = vmatpush2.msra.mxu0 0.0
        %1197 = vmatprep.subr.mxu0 0.0
        %1198 = vmatpush2.msra.mxu0 0.0
        %1199 = vmatprep.subr.mxu0 0.0
        %1200 = vmatpush2.msra.mxu0 0.0
        %1201 = vmatprep.subr.mxu0 0.0
        %1202 = vmatpush2.msra.mxu0 0.0
        %1203 = vmatprep.subr.mxu0 0.0
        %1204 = vmatpush2.msra.mxu0 0.0
        %1205 = vmatprep.subr.mxu0 0.0
        %1206 = vmatpush2.msra.mxu0 0.0
        %1207 = vmatprep.subr.mxu0 0.0
        %1208 = vmatpush2.msra.mxu0 0.0
        %1209 = vmatprep.subr.mxu0 0.0
        %1210 = vmatpush2.msra.mxu0 0.0
        %1211 = vmatprep.subr.mxu0 0.0
        %1212 = vmatpush2.msra.mxu0 0.0
        %1213 = vmatprep.subr.mxu0 0.0
        %1214 = vmatpush2.msra.mxu0 0.0
        %1215 = vmatprep.subr.mxu0 0.0
        %1216 = vmatpush2.msra.mxu0 0.0
        %1217 = vmatprep.subr.mxu0 0.0
        %1218 = vmatpush2.msra.mxu0 0.0
        %1219 = vmatprep.subr.mxu0 0.0
        %1220 = vmatpush2.msra.mxu0 0.0
        %1221 = vmatprep.subr.mxu0 0.0
        %1222 = vmatpush2.msra.mxu0 0.0
        %1223 = vmatprep.subr.mxu0 0.0
        %1224 = vmatpush2.msra.mxu0 0.0
        %1225 = vmatprep.mubr.f32.mxu0 0.0
        %1226 = vmatmul.mubr.f32.gmra.mxu0 %v538
        %v1227 = vpop.f32.mrf.mxu0
        %v1228 = vadd.f32 1e-05, %v1227
        %v1229 = vpop.f32.mrf.mxu0
        %1230 = vdwg.mxu0
        %v1231 = vrsqrt.pop %v1228
        %v1232 = vmul.f32 %v1231, %v1073
        %1234 = vset.pattern.permute.xlu0 0
        %1235 = vperm.xlu0 %1234, %v1232
        %v1236 = vpop.permute.xlu0 %1235
        %v1238 = vmul.f32 %v1154, %v1236
        %v1239 = vmul.f32 %v1155, %v1236
        %1241 = vset.pattern.permute.xlu0 0
        %1242 = vperm.xlu0 %1241, %v1075
        %v1243 = vpop.permute.xlu0 %1242
        %v1245 = vadd.f32 %v1238, %v1243
        %v1246 = vadd.f32 %v1239, %v1243
        %s1247 = scalar_lea.vmem %s2, 8
        %v1248 = vld [vmem:[%s1247] sm:$0xff]
        %1249 = vst [vmem:[#allocation2 + $0x8] sm:$0xff] %v1245
        %1250 = vst [vmem:[#allocation2 + $0x10] sm:$0xff] %v1246
        %v1251 = vld [vmem:[#allocation2] sm:$0xff]
        %v1252 = vld [vmem:[#allocation2 + $0x8] sm:$0xff]
        %v1253 = vld [vmem:[#allocation2 + $0x10] sm:$0xff]
        %1257 = vrot.lane.b32.xlu0 %v1251, 17
        %v1258 = vpop.permute.xlu0 %1257
        %1259 = vrot.lane.b32.xlu0 %v1252, 17
        %v1260 = vpop.permute.xlu0 %1259
        %1261 = vrot.lane.b32.xlu0 %v1253, 17
        %v1262 = vpop.permute.xlu0 %1261
        %v1263 = vsel %vm352, %v1258, %v1260
        %v1264 = vsel %vm352, %v1260, %v1262
        %v1267 = vsel %vm341, %v1263, 0.0
        %v1268 = vsel %vm342, %v1264, 0.0
        %1269 = vrot.lane.b32.xlu0 %v1251, 15
        %v1270 = vpop.permute.xlu0 %1269
        %1271 = vrot.lane.b32.xlu0 %v1252, 15
        %v1272 = vpop.permute.xlu0 %1271
        %1273 = vrot.lane.b32.xlu0 %v1253, 15
        %v1274 = vpop.permute.xlu0 %1273
        %v1275 = vsel %vm369, %v1270, %v1272
        %v1276 = vsel %vm369, %v1272, %v1274
        %v1279 = vsel %vm361, %v1275, 0.0
        %v1280 = vsel %vm362, %v1276, 0.0
        %1281 = vrot.lane.b32.xlu0 %v1251, 1
        %v1282 = vpop.permute.xlu0 %1281
        %1283 = vrot.lane.b32.xlu0 %v1252, 1
        %v1284 = vpop.permute.xlu0 %1283
        %1285 = vrot.lane.b32.xlu0 %v1253, 1
        %v1286 = vpop.permute.xlu0 %1285
        %v1287 = vsel %vm382, %v1282, %v1284
        %v1288 = vsel %vm382, %v1284, %v1286
        %v1291 = vsel %vm341, %v1287, 0.0
        %v1292 = vsel %vm342, %v1288, 0.0
        %v1293 = vld [vmem:[#allocation2 + $0x8] sm:$0xff]
        %v1294 = vld [vmem:[#allocation2 + $0x10] sm:$0xff]
        %v1295 = vld [vmem:[#allocation2 + $0x18] sm:$0xff]
        %1299 = vrot.lane.b32.xlu0 %v1293, 127
        %v1300 = vpop.permute.xlu0 %1299
        %1301 = vrot.lane.b32.xlu0 %v1294, 127
        %v1302 = vpop.permute.xlu0 %1301
        %1303 = vrot.lane.b32.xlu0 %v1295, 127
        %v1304 = vpop.permute.xlu0 %1303
        %v1305 = vsel %vm401, %v1300, %v1302
        %v1306 = vsel %vm401, %v1302, %v1304
        %v1309 = vsel %vm361, %v1305, 0.0
        %v1310 = vsel %vm362, %v1306, 0.0
        %1311 = vrot.lane.b32.xlu0 %v1293, 113
        %v1312 = vpop.permute.xlu0 %1311
        %1313 = vrot.lane.b32.xlu0 %v1294, 113
        %v1314 = vpop.permute.xlu0 %1313
        %1315 = vrot.lane.b32.xlu0 %v1295, 113
        %v1316 = vpop.permute.xlu0 %1315
        %v1317 = vsel %vm414, %v1312, %v1314
        %v1318 = vsel %vm414, %v1314, %v1316
        %v1321 = vsel %vm341, %v1317, 0.0
        %v1322 = vsel %vm342, %v1318, 0.0
        %1323 = vrot.lane.b32.xlu0 %v1293, 111
        %v1324 = vpop.permute.xlu0 %1323
        %1325 = vrot.lane.b32.xlu0 %v1294, 111
        %v1326 = vpop.permute.xlu0 %1325
        %1327 = vrot.lane.b32.xlu0 %v1295, 111
        %v1328 = vpop.permute.xlu0 %1327
        %v1329 = vsel %vm427, %v1324, %v1326
        %v1330 = vsel %vm427, %v1326, %v1328
        %v1333 = vsel %vm361, %v1329, 0.0
        %v1334 = vsel %vm362, %v1330, 0.0
        %1335 = vrot.lane.b32.xlu0 %v1251, 16
        %v1336 = vpop.permute.xlu0 %1335
        %1337 = vrot.lane.b32.xlu0 %v1252, 16
        %v1338 = vpop.permute.xlu0 %1337
        %1339 = vrot.lane.b32.xlu0 %v1253, 16
        %v1340 = vpop.permute.xlu0 %1339
        %v1341 = vsel %vm440, %v1336, %v1338
        %v1342 = vsel %vm440, %v1338, %v1340
        %1345 = vrot.lane.b32.xlu0 %v1293, 112
        %v1346 = vpop.permute.xlu0 %1345
        %1347 = vrot.lane.b32.xlu0 %v1294, 112
        %v1348 = vpop.permute.xlu0 %1347
        %1349 = vrot.lane.b32.xlu0 %v1295, 112
        %v1350 = vpop.permute.xlu0 %1349
        %v1351 = vsel %vm451, %v1346, %v1348
        %v1352 = vsel %vm451, %v1348, %v1350
        %v1356 = vsel %vm456, %v1248, 0
        %1358 = vmatprep.subr.mxu0 0.0
        %1359 = vmatpush1.msra.mxu0 0.0
        %1360 = vmatprep.subr.mxu0 0.0
        %1361 = vmatpush1.msra.mxu0 0.0
        %1362 = vmatprep.subr.mxu0 0.0
        %1363 = vmatpush1.msra.mxu0 0.0
        %1364 = vmatprep.subr.mxu0 0.0
        %1365 = vmatpush1.msra.mxu0 0.0
        %1366 = vmatprep.subr.mxu0 0.0
        %1367 = vmatpush1.msra.mxu0 0.0
        %1368 = vmatprep.subr.mxu0 0.0
        %1369 = vmatpush1.msra.mxu0 0.0
        %1370 = vmatprep.subr.mxu0 0.0
        %1371 = vmatpush1.msra.mxu0 0.0
        %1372 = vmatprep.subr.mxu0 %v1334
        %1373 = vmatpush1.msra.mxu0 %v1333
        %1374 = vmatprep.subr.mxu0 %v1352
        %1375 = vmatpush1.msra.mxu0 %v1351
        %1376 = vmatprep.subr.mxu0 %v1322
        %1377 = vmatpush1.msra.mxu0 %v1321
        %1378 = vmatprep.subr.mxu0 %v1310
        %1379 = vmatpush1.msra.mxu0 %v1309
        %1380 = vmatprep.subr.mxu0 %v1253
        %1381 = vmatpush1.msra.mxu0 %v1252
        %1382 = vmatprep.subr.mxu0 %v1292
        %1383 = vmatpush1.msra.mxu0 %v1291
        %1384 = vmatprep.subr.mxu0 %v1280
        %1385 = vmatpush1.msra.mxu0 %v1279
        %1386 = vmatprep.subr.mxu0 %v1342
        %1387 = vmatpush1.msra.mxu0 %v1341
        %1388 = vmatprep.subr.mxu0 %v1268
        %1389 = vmatpush1.msra.mxu0 %v1267
        %1390 = vmatprep.subr.mxu0 0.0
        %1391 = vmatpush2.msra.mxu0 0.0
        %1392 = vmatprep.subr.mxu0 0.0
        %1393 = vmatpush2.msra.mxu0 0.0
        %1394 = vmatprep.subr.mxu0 0.0
        %1395 = vmatpush2.msra.mxu0 0.0
        %1396 = vmatprep.subr.mxu0 0.0
        %1397 = vmatpush2.msra.mxu0 0.0
        %1398 = vmatprep.subr.mxu0 0.0
        %1399 = vmatpush2.msra.mxu0 0.0
        %1400 = vmatprep.subr.mxu0 0.0
        %1401 = vmatpush2.msra.mxu0 0.0
        %1402 = vmatprep.subr.mxu0 0.0
        %1403 = vmatpush2.msra.mxu0 0.0
        %1404 = vmatprep.subr.mxu0 0.0
        %1405 = vmatpush2.msra.mxu0 0.0
        %1406 = vmatprep.subr.mxu0 0.0
        %1407 = vmatpush2.msra.mxu0 0.0
        %1408 = vmatprep.subr.mxu0 0.0
        %1409 = vmatpush2.msra.mxu0 0.0
        %1410 = vmatprep.subr.mxu0 0.0
        %1411 = vmatpush2.msra.mxu0 0.0
        %1412 = vmatprep.subr.mxu0 0.0
        %1413 = vmatpush2.msra.mxu0 0.0
        %1414 = vmatprep.subr.mxu0 0.0
        %1415 = vmatpush2.msra.mxu0 0.0
        %1416 = vmatprep.subr.mxu0 0.0
        %1417 = vmatpush2.msra.mxu0 0.0
        %1418 = vmatprep.subr.mxu0 0.0
        %1419 = vmatpush2.msra.mxu0 0.0
        %1420 = vmatprep.subr.mxu0 0.0
        %1421 = vmatpush2.msra.mxu0 0.0
        %1422 = vmatprep.mubr.f32.mxu0 0.0
        %1423 = vmatmul.mubr.f32.gmra.mxu0 %v1356
        %v1424 = vpop.f32.mrf.mxu0
        %v1425 = vadd.f32 0.0, %v1424
        %v1426 = vpop.f32.mrf.mxu0
        %v1427 = vadd.f32 0.0, %v1426
        %1428 = vdwg.mxu0
        %s1429 = scalar_lea.vmem %s4, 24
        %v1430 = vld [vmem:[%s1429] sm:$0xff]
        %s1431 = scalar_lea.vmem %s5, 24
        %v1432 = vld [vmem:[%s1431] sm:$0xff]
        %v1433 = vadd.f32 %v1425, %v1427
        %1434 = vadd.xlane.f32.xlu0 %v1433
        %v1435 = vpop.xlane.xlu0 %1434
        %1436 = vmatprep.subr.mxu0 0.0
        %1437 = vmatpush1.msra.mxu0 0.0
        %1438 = vmatprep.subr.mxu0 0.0
        %1439 = vmatpush1.msra.mxu0 0.0
        %1440 = vmatprep.subr.mxu0 0.0
        %1441 = vmatpush1.msra.mxu0 0.0
        %1442 = vmatprep.subr.mxu0 0.0
        %1443 = vmatpush1.msra.mxu0 0.0
        %1444 = vmatprep.subr.mxu0 0.0
        %1445 = vmatpush1.msra.mxu0 0.0
        %1446 = vmatprep.subr.mxu0 0.0
        %1447 = vmatpush1.msra.mxu0 0.0
        %1448 = vmatprep.subr.mxu0 0.0
        %1449 = vmatpush1.msra.mxu0 0.0
        %1450 = vmatprep.subr.mxu0 0.0
        %1451 = vmatpush1.msra.mxu0 0.0
        %1452 = vmatprep.subr.mxu0 0.0
        %1453 = vmatpush1.msra.mxu0 0.0
        %1454 = vmatprep.subr.mxu0 0.0
        %1455 = vmatpush1.msra.mxu0 0.0
        %1456 = vmatprep.subr.mxu0 0.0
        %1457 = vmatpush1.msra.mxu0 0.0
        %1458 = vmatprep.subr.mxu0 0.0
        %1459 = vmatpush1.msra.mxu0 0.0
        %1460 = vmatprep.subr.mxu0 0.0
        %1461 = vmatpush1.msra.mxu0 0.0
        %1462 = vmatprep.subr.mxu0 0.0
        %1463 = vmatpush1.msra.mxu0 0.0
        %1464 = vmatprep.subr.mxu0 0.0
        %1465 = vmatpush1.msra.mxu0 0.0
        %1466 = vmatprep.subr.mxu0 0.0
        %1467 = vmatpush1.msra.mxu0 %v1435
        %1468 = vmatprep.subr.mxu0 0.0
        %1469 = vmatpush2.msra.mxu0 0.0
        %1470 = vmatprep.subr.mxu0 0.0
        %1471 = vmatpush2.msra.mxu0 0.0
        %1472 = vmatprep.subr.mxu0 0.0
        %1473 = vmatpush2.msra.mxu0 0.0
        %1474 = vmatprep.subr.mxu0 0.0
        %1475 = vmatpush2.msra.mxu0 0.0
        %1476 = vmatprep.subr.mxu0 0.0
        %1477 = vmatpush2.msra.mxu0 0.0
        %1478 = vmatprep.subr.mxu0 0.0
        %1479 = vmatpush2.msra.mxu0 0.0
        %1480 = vmatprep.subr.mxu0 0.0
        %1481 = vmatpush2.msra.mxu0 0.0
        %1482 = vmatprep.subr.mxu0 0.0
        %1483 = vmatpush2.msra.mxu0 0.0
        %1484 = vmatprep.subr.mxu0 0.0
        %1485 = vmatpush2.msra.mxu0 0.0
        %1486 = vmatprep.subr.mxu0 0.0
        %1487 = vmatpush2.msra.mxu0 0.0
        %1488 = vmatprep.subr.mxu0 0.0
        %1489 = vmatpush2.msra.mxu0 0.0
        %1490 = vmatprep.subr.mxu0 0.0
        %1491 = vmatpush2.msra.mxu0 0.0
        %1492 = vmatprep.subr.mxu0 0.0
        %1493 = vmatpush2.msra.mxu0 0.0
        %1494 = vmatprep.subr.mxu0 0.0
        %1495 = vmatpush2.msra.mxu0 0.0
        %1496 = vmatprep.subr.mxu0 0.0
        %1497 = vmatpush2.msra.mxu0 0.0
        %1498 = vmatprep.subr.mxu0 0.0
        %1499 = vmatpush2.msra.mxu0 0.0
        %1500 = vmatprep.mubr.f32.mxu0 0.0
        %1501 = vmatmul.mubr.f32.gmra.mxu0 %v538
        %v1502 = vpop.f32.mrf.mxu0
        %v1503 = vadd.f32 0.0, %v1502
        %v1504 = vpop.f32.mrf.mxu0
        %1505 = vdwg.mxu0
        %1507 = vset.pattern.permute.xlu0 0
        %1508 = vperm.xlu0 %1507, %v1503
        %v1509 = vpop.permute.xlu0 %1508
        %v1511 = vsub.f32 %v1425, %v1509
        %v1512 = vsub.f32 %v1427, %v1509
        %v1513 = vmul.f32 %v1511, %v1511
        %v1514 = vmul.f32 %v1512, %v1512
        %v1515 = vadd.f32 %v1513, %v1514
        %1516 = vadd.xlane.f32.xlu0 %v1515
        %v1517 = vpop.xlane.xlu0 %1516
        %1518 = vmatprep.subr.mxu0 0.0
        %1519 = vmatpush1.msra.mxu0 0.0
        %1520 = vmatprep.subr.mxu0 0.0
        %1521 = vmatpush1.msra.mxu0 0.0
        %1522 = vmatprep.subr.mxu0 0.0
        %1523 = vmatpush1.msra.mxu0 0.0
        %1524 = vmatprep.subr.mxu0 0.0
        %1525 = vmatpush1.msra.mxu0 0.0
        %1526 = vmatprep.subr.mxu0 0.0
        %1527 = vmatpush1.msra.mxu0 0.0
        %1528 = vmatprep.subr.mxu0 0.0
        %1529 = vmatpush1.msra.mxu0 0.0
        %1530 = vmatprep.subr.mxu0 0.0
        %1531 = vmatpush1.msra.mxu0 0.0
        %1532 = vmatprep.subr.mxu0 0.0
        %1533 = vmatpush1.msra.mxu0 0.0
        %1534 = vmatprep.subr.mxu0 0.0
        %1535 = vmatpush1.msra.mxu0 0.0
        %1536 = vmatprep.subr.mxu0 0.0
        %1537 = vmatpush1.msra.mxu0 0.0
        %1538 = vmatprep.subr.mxu0 0.0
        %1539 = vmatpush1.msra.mxu0 0.0
        %1540 = vmatprep.subr.mxu0 0.0
        %1541 = vmatpush1.msra.mxu0 0.0
        %1542 = vmatprep.subr.mxu0 0.0
        %1543 = vmatpush1.msra.mxu0 0.0
        %1544 = vmatprep.subr.mxu0 0.0
        %1545 = vmatpush1.msra.mxu0 0.0
        %1546 = vmatprep.subr.mxu0 0.0
        %1547 = vmatpush1.msra.mxu0 0.0
        %1548 = vmatprep.subr.mxu0 0.0
        %1549 = vmatpush1.msra.mxu0 %v1517
        %1550 = vmatprep.subr.mxu0 0.0
        %1551 = vmatpush2.msra.mxu0 0.0
        %1552 = vmatprep.subr.mxu0 0.0
        %1553 = vmatpush2.msra.mxu0 0.0
        %1554 = vmatprep.subr.mxu0 0.0
        %1555 = vmatpush2.msra.mxu0 0.0
        %1556 = vmatprep.subr.mxu0 0.0
        %1557 = vmatpush2.msra.mxu0 0.0
        %1558 = vmatprep.subr.mxu0 0.0
        %1559 = vmatpush2.msra.mxu0 0.0
        %1560 = vmatprep.subr.mxu0 0.0
        %1561 = vmatpush2.msra.mxu0 0.0
        %1562 = vmatprep.subr.mxu0 0.0
        %1563 = vmatpush2.msra.mxu0 0.0
        %1564 = vmatprep.subr.mxu0 0.0
        %1565 = vmatpush2.msra.mxu0 0.0
        %1566 = vmatprep.subr.mxu0 0.0
        %1567 = vmatpush2.msra.mxu0 0.0
        %1568 = vmatprep.subr.mxu0 0.0
        %1569 = vmatpush2.msra.mxu0 0.0
        %1570 = vmatprep.subr.mxu0 0.0
        %1571 = vmatpush2.msra.mxu0 0.0
        %1572 = vmatprep.subr.mxu0 0.0
        %1573 = vmatpush2.msra.mxu0 0.0
        %1574 = vmatprep.subr.mxu0 0.0
        %1575 = vmatpush2.msra.mxu0 0.0
        %1576 = vmatprep.subr.mxu0 0.0
        %1577 = vmatpush2.msra.mxu0 0.0
        %1578 = vmatprep.subr.mxu0 0.0
        %1579 = vmatpush2.msra.mxu0 0.0
        %1580 = vmatprep.subr.mxu0 0.0
        %1581 = vmatpush2.msra.mxu0 0.0
        %1582 = vmatprep.mubr.f32.mxu0 0.0
        %1583 = vmatmul.mubr.f32.gmra.mxu0 %v538
        %v1584 = vpop.f32.mrf.mxu0
        %v1585 = vadd.f32 1e-05, %v1584
        %v1586 = vpop.f32.mrf.mxu0
        %1587 = vdwg.mxu0
        %v1588 = vrsqrt.pop %v1585
        %v1589 = vmul.f32 %v1588, %v1430
        %1591 = vset.pattern.permute.xlu0 0
        %1592 = vperm.xlu0 %1591, %v1589
        %v1593 = vpop.permute.xlu0 %1592
        %v1595 = vmul.f32 %v1511, %v1593
        %v1596 = vmul.f32 %v1512, %v1593
        %1598 = vset.pattern.permute.xlu0 0
        %1599 = vperm.xlu0 %1598, %v1432
        %v1600 = vpop.permute.xlu0 %1599
        %v1602 = vadd.f32 %v1595, %v1600
        %v1603 = vadd.f32 %v1596, %v1600
        %v1604 = vmax.f32 %v1602, 0.0
        %v1605 = vmax.f32 %v1603, 0.0
        %s1606 = scalar_lea.vmem %s3, 8
        %v1607 = vld [vmem:[%s1606] sm:$0xff]
        %1608 = vst [vmem:[#allocation2 + $0x8] sm:$0xff] %v1604
        %1609 = vst [vmem:[#allocation2 + $0x10] sm:$0xff] %v1605
        %v1610 = vld [vmem:[#allocation2] sm:$0xff]
        %v1611 = vld [vmem:[#allocation2 + $0x8] sm:$0xff]
        %v1612 = vld [vmem:[#allocation2 + $0x10] sm:$0xff]
        %1616 = vrot.lane.b32.xlu0 %v1610, 17
        %v1617 = vpop.permute.xlu0 %1616
        %1618 = vrot.lane.b32.xlu0 %v1611, 17
        %v1619 = vpop.permute.xlu0 %1618
        %1620 = vrot.lane.b32.xlu0 %v1612, 17
        %v1621 = vpop.permute.xlu0 %1620
        %v1622 = vsel %vm352, %v1617, %v1619
        %v1623 = vsel %vm352, %v1619, %v1621
        %v1626 = vsel %vm341, %v1622, 0.0
        %v1627 = vsel %vm342, %v1623, 0.0
        %1628 = vrot.lane.b32.xlu0 %v1610, 15
        %v1629 = vpop.permute.xlu0 %1628
        %1630 = vrot.lane.b32.xlu0 %v1611, 15
        %v1631 = vpop.permute.xlu0 %1630
        %1632 = vrot.lane.b32.xlu0 %v1612, 15
        %v1633 = vpop.permute.xlu0 %1632
        %v1634 = vsel %vm369, %v1629, %v1631
        %v1635 = vsel %vm369, %v1631, %v1633
        %v1638 = vsel %vm361, %v1634, 0.0
        %v1639 = vsel %vm362, %v1635, 0.0
        %1640 = vrot.lane.b32.xlu0 %v1610, 1
        %v1641 = vpop.permute.xlu0 %1640
        %1642 = vrot.lane.b32.xlu0 %v1611, 1
        %v1643 = vpop.permute.xlu0 %1642
        %1644 = vrot.lane.b32.xlu0 %v1612, 1
        %v1645 = vpop.permute.xlu0 %1644
        %v1646 = vsel %vm382, %v1641, %v1643
        %v1647 = vsel %vm382, %v1643, %v1645
        %v1650 = vsel %vm341, %v1646, 0.0
        %v1651 = vsel %vm342, %v1647, 0.0
        %v1652 = vld [vmem:[#allocation2 + $0x8] sm:$0xff]
        %v1653 = vld [vmem:[#allocation2 + $0x10] sm:$0xff]
        %v1654 = vld [vmem:[#allocation2 + $0x18] sm:$0xff]
        %1658 = vrot.lane.b32.xlu0 %v1652, 127
        %v1659 = vpop.permute.xlu0 %1658
        %1660 = vrot.lane.b32.xlu0 %v1653, 127
        %v1661 = vpop.permute.xlu0 %1660
        %1662 = vrot.lane.b32.xlu0 %v1654, 127
        %v1663 = vpop.permute.xlu0 %1662
        %v1664 = vsel %vm401, %v1659, %v1661
        %v1665 = vsel %vm401, %v1661, %v1663
        %v1668 = vsel %vm361, %v1664, 0.0
        %v1669 = vsel %vm362, %v1665, 0.0
        %1670 = vrot.lane.b32.xlu0 %v1652, 113
        %v1671 = vpop.permute.xlu0 %1670
        %1672 = vrot.lane.b32.xlu0 %v1653, 113
        %v1673 = vpop.permute.xlu0 %1672
        %1674 = vrot.lane.b32.xlu0 %v1654, 113
        %v1675 = vpop.permute.xlu0 %1674
        %v1676 = vsel %vm414, %v1671, %v1673
        %v1677 = vsel %vm414, %v1673, %v1675
        %v1680 = vsel %vm341, %v1676, 0.0
        %v1681 = vsel %vm342, %v1677, 0.0
        %1682 = vrot.lane.b32.xlu0 %v1652, 111
        %v1683 = vpop.permute.xlu0 %1682
        %1684 = vrot.lane.b32.xlu0 %v1653, 111
        %v1685 = vpop.permute.xlu0 %1684
        %1686 = vrot.lane.b32.xlu0 %v1654, 111
        %v1687 = vpop.permute.xlu0 %1686
        %v1688 = vsel %vm427, %v1683, %v1685
        %v1689 = vsel %vm427, %v1685, %v1687
        %v1692 = vsel %vm361, %v1688, 0.0
        %v1693 = vsel %vm362, %v1689, 0.0
        %1694 = vrot.lane.b32.xlu0 %v1610, 16
        %v1695 = vpop.permute.xlu0 %1694
        %1696 = vrot.lane.b32.xlu0 %v1611, 16
        %v1697 = vpop.permute.xlu0 %1696
        %1698 = vrot.lane.b32.xlu0 %v1612, 16
        %v1699 = vpop.permute.xlu0 %1698
        %v1700 = vsel %vm440, %v1695, %v1697
        %v1701 = vsel %vm440, %v1697, %v1699
        %1704 = vrot.lane.b32.xlu0 %v1652, 112
        %v1705 = vpop.permute.xlu0 %1704
        %1706 = vrot.lane.b32.xlu0 %v1653, 112
        %v1707 = vpop.permute.xlu0 %1706
        %1708 = vrot.lane.b32.xlu0 %v1654, 112
        %v1709 = vpop.permute.xlu0 %1708
        %v1710 = vsel %vm451, %v1705, %v1707
        %v1711 = vsel %vm451, %v1707, %v1709
        %v1715 = vsel %vm456, %v1607, 0
        %1717 = vmatprep.subr.mxu0 0.0
        %1718 = vmatpush1.msra.mxu0 0.0
        %1719 = vmatprep.subr.mxu0 0.0
        %1720 = vmatpush1.msra.mxu0 0.0
        %1721 = vmatprep.subr.mxu0 0.0
        %1722 = vmatpush1.msra.mxu0 0.0
        %1723 = vmatprep.subr.mxu0 0.0
        %1724 = vmatpush1.msra.mxu0 0.0
        %1725 = vmatprep.subr.mxu0 0.0
        %1726 = vmatpush1.msra.mxu0 0.0
        %1727 = vmatprep.subr.mxu0 0.0
        %1728 = vmatpush1.msra.mxu0 0.0
        %1729 = vmatprep.subr.mxu0 0.0
        %1730 = vmatpush1.msra.mxu0 0.0
        %1731 = vmatprep.subr.mxu0 %v1693
        %1732 = vmatpush1.msra.mxu0 %v1692
        %1733 = vmatprep.subr.mxu0 %v1711
        %1734 = vmatpush1.msra.mxu0 %v1710
        %1735 = vmatprep.subr.mxu0 %v1681
        %1736 = vmatpush1.msra.mxu0 %v1680
        %1737 = vmatprep.subr.mxu0 %v1669
        %1738 = vmatpush1.msra.mxu0 %v1668
        %1739 = vmatprep.subr.mxu0 %v1612
        %1740 = vmatpush1.msra.mxu0 %v1611
        %1741 = vmatprep.subr.mxu0 %v1651
        %1742 = vmatpush1.msra.mxu0 %v1650
        %1743 = vmatprep.subr.mxu0 %v1639
        %1744 = vmatpush1.msra.mxu0 %v1638
        %1745 = vmatprep.subr.mxu0 %v1701
        %1746 = vmatpush1.msra.mxu0 %v1700
        %1747 = vmatprep.subr.mxu0 %v1627
        %1748 = vmatpush1.msra.mxu0 %v1626
        %1749 = vmatprep.subr.mxu0 0.0
        %1750 = vmatpush2.msra.mxu0 0.0
        %1751 = vmatprep.subr.mxu0 0.0
        %1752 = vmatpush2.msra.mxu0 0.0
        %1753 = vmatprep.subr.mxu0 0.0
        %1754 = vmatpush2.msra.mxu0 0.0
        %1755 = vmatprep.subr.mxu0 0.0
        %1756 = vmatpush2.msra.mxu0 0.0
        %1757 = vmatprep.subr.mxu0 0.0
        %1758 = vmatpush2.msra.mxu0 0.0
        %1759 = vmatprep.subr.mxu0 0.0
        %1760 = vmatpush2.msra.mxu0 0.0
        %1761 = vmatprep.subr.mxu0 0.0
        %1762 = vmatpush2.msra.mxu0 0.0
        %1763 = vmatprep.subr.mxu0 0.0
        %1764 = vmatpush2.msra.mxu0 0.0
        %1765 = vmatprep.subr.mxu0 0.0
        %1766 = vmatpush2.msra.mxu0 0.0
        %1767 = vmatprep.subr.mxu0 0.0
        %1768 = vmatpush2.msra.mxu0 0.0
        %1769 = vmatprep.subr.mxu0 0.0
        %1770 = vmatpush2.msra.mxu0 0.0
        %1771 = vmatprep.subr.mxu0 0.0
        %1772 = vmatpush2.msra.mxu0 0.0
        %1773 = vmatprep.subr.mxu0 0.0
        %1774 = vmatpush2.msra.mxu0 0.0
        %1775 = vmatprep.subr.mxu0 0.0
        %1776 = vmatpush2.msra.mxu0 0.0
        %1777 = vmatprep.subr.mxu0 0.0
        %1778 = vmatpush2.msra.mxu0 0.0
        %1779 = vmatprep.subr.mxu0 0.0
        %1780 = vmatpush2.msra.mxu0 0.0
        %1781 = vmatprep.mubr.f32.mxu0 0.0
        %1782 = vmatmul.mubr.f32.gmra.mxu0 %v1715
        %v1783 = vpop.f32.mrf.mxu0
        %v1784 = vadd.f32 0.0, %v1783
        %v1785 = vpop.f32.mrf.mxu0
        %v1786 = vadd.f32 0.0, %v1785
        %1787 = vdwg.mxu0
        %s1788 = scalar_lea.vmem %s4, 32
        %v1789 = vld [vmem:[%s1788] sm:$0xff]
        %s1790 = scalar_lea.vmem %s5, 32
        %v1791 = vld [vmem:[%s1790] sm:$0xff]
        %v1792 = vadd.f32 %v1784, %v1786
        %1793 = vadd.xlane.f32.xlu0 %v1792
        %v1794 = vpop.xlane.xlu0 %1793
        %1795 = vmatprep.subr.mxu0 0.0
        %1796 = vmatpush1.msra.mxu0 0.0
        %1797 = vmatprep.subr.mxu0 0.0
        %1798 = vmatpush1.msra.mxu0 0.0
        %1799 = vmatprep.subr.mxu0 0.0
        %1800 = vmatpush1.msra.mxu0 0.0
        %1801 = vmatprep.subr.mxu0 0.0
        %1802 = vmatpush1.msra.mxu0 0.0
        %1803 = vmatprep.subr.mxu0 0.0
        %1804 = vmatpush1.msra.mxu0 0.0
        %1805 = vmatprep.subr.mxu0 0.0
        %1806 = vmatpush1.msra.mxu0 0.0
        %1807 = vmatprep.subr.mxu0 0.0
        %1808 = vmatpush1.msra.mxu0 0.0
        %1809 = vmatprep.subr.mxu0 0.0
        %1810 = vmatpush1.msra.mxu0 0.0
        %1811 = vmatprep.subr.mxu0 0.0
        %1812 = vmatpush1.msra.mxu0 0.0
        %1813 = vmatprep.subr.mxu0 0.0
        %1814 = vmatpush1.msra.mxu0 0.0
        %1815 = vmatprep.subr.mxu0 0.0
        %1816 = vmatpush1.msra.mxu0 0.0
        %1817 = vmatprep.subr.mxu0 0.0
        %1818 = vmatpush1.msra.mxu0 0.0
        %1819 = vmatprep.subr.mxu0 0.0
        %1820 = vmatpush1.msra.mxu0 0.0
        %1821 = vmatprep.subr.mxu0 0.0
        %1822 = vmatpush1.msra.mxu0 0.0
        %1823 = vmatprep.subr.mxu0 0.0
        %1824 = vmatpush1.msra.mxu0 0.0
        %1825 = vmatprep.subr.mxu0 0.0
        %1826 = vmatpush1.msra.mxu0 %v1794
        %1827 = vmatprep.subr.mxu0 0.0
        %1828 = vmatpush2.msra.mxu0 0.0
        %1829 = vmatprep.subr.mxu0 0.0
        %1830 = vmatpush2.msra.mxu0 0.0
        %1831 = vmatprep.subr.mxu0 0.0
        %1832 = vmatpush2.msra.mxu0 0.0
        %1833 = vmatprep.subr.mxu0 0.0
        %1834 = vmatpush2.msra.mxu0 0.0
        %1835 = vmatprep.subr.mxu0 0.0
        %1836 = vmatpush2.msra.mxu0 0.0
        %1837 = vmatprep.subr.mxu0 0.0
        %1838 = vmatpush2.msra.mxu0 0.0
        %1839 = vmatprep.subr.mxu0 0.0
        %1840 = vmatpush2.msra.mxu0 0.0
        %1841 = vmatprep.subr.mxu0 0.0
        %1842 = vmatpush2.msra.mxu0 0.0
        %1843 = vmatprep.subr.mxu0 0.0
        %1844 = vmatpush2.msra.mxu0 0.0
        %1845 = vmatprep.subr.mxu0 0.0
        %1846 = vmatpush2.msra.mxu0 0.0
        %1847 = vmatprep.subr.mxu0 0.0
        %1848 = vmatpush2.msra.mxu0 0.0
        %1849 = vmatprep.subr.mxu0 0.0
        %1850 = vmatpush2.msra.mxu0 0.0
        %1851 = vmatprep.subr.mxu0 0.0
        %1852 = vmatpush2.msra.mxu0 0.0
        %1853 = vmatprep.subr.mxu0 0.0
        %1854 = vmatpush2.msra.mxu0 0.0
        %1855 = vmatprep.subr.mxu0 0.0
        %1856 = vmatpush2.msra.mxu0 0.0
        %1857 = vmatprep.subr.mxu0 0.0
        %1858 = vmatpush2.msra.mxu0 0.0
        %1859 = vmatprep.mubr.f32.mxu0 0.0
        %1860 = vmatmul.mubr.f32.gmra.mxu0 %v538
        %v1861 = vpop.f32.mrf.mxu0
        %v1862 = vadd.f32 0.0, %v1861
        %v1863 = vpop.f32.mrf.mxu0
        %1864 = vdwg.mxu0
        %1866 = vset.pattern.permute.xlu0 0
        %1867 = vperm.xlu0 %1866, %v1862
        %v1868 = vpop.permute.xlu0 %1867
        %v1870 = vsub.f32 %v1784, %v1868
        %v1871 = vsub.f32 %v1786, %v1868
        %v1872 = vmul.f32 %v1870, %v1870
        %v1873 = vmul.f32 %v1871, %v1871
        %v1874 = vadd.f32 %v1872, %v1873
        %1875 = vadd.xlane.f32.xlu0 %v1874
        %v1876 = vpop.xlane.xlu0 %1875
        %1877 = vmatprep.subr.mxu0 0.0
        %1878 = vmatpush1.msra.mxu0 0.0
        %1879 = vmatprep.subr.mxu0 0.0
        %1880 = vmatpush1.msra.mxu0 0.0
        %1881 = vmatprep.subr.mxu0 0.0
        %1882 = vmatpush1.msra.mxu0 0.0
        %1883 = vmatprep.subr.mxu0 0.0
        %1884 = vmatpush1.msra.mxu0 0.0
        %1885 = vmatprep.subr.mxu0 0.0
        %1886 = vmatpush1.msra.mxu0 0.0
        %1887 = vmatprep.subr.mxu0 0.0
        %1888 = vmatpush1.msra.mxu0 0.0
        %1889 = vmatprep.subr.mxu0 0.0
        %1890 = vmatpush1.msra.mxu0 0.0
        %1891 = vmatprep.subr.mxu0 0.0
        %1892 = vmatpush1.msra.mxu0 0.0
        %1893 = vmatprep.subr.mxu0 0.0
        %1894 = vmatpush1.msra.mxu0 0.0
        %1895 = vmatprep.subr.mxu0 0.0
        %1896 = vmatpush1.msra.mxu0 0.0
        %1897 = vmatprep.subr.mxu0 0.0
        %1898 = vmatpush1.msra.mxu0 0.0
        %1899 = vmatprep.subr.mxu0 0.0
        %1900 = vmatpush1.msra.mxu0 0.0
        %1901 = vmatprep.subr.mxu0 0.0
        %1902 = vmatpush1.msra.mxu0 0.0
        %1903 = vmatprep.subr.mxu0 0.0
        %1904 = vmatpush1.msra.mxu0 0.0
        %1905 = vmatprep.subr.mxu0 0.0
        %1906 = vmatpush1.msra.mxu0 0.0
        %1907 = vmatprep.subr.mxu0 0.0
        %1908 = vmatpush1.msra.mxu0 %v1876
        %1909 = vmatprep.subr.mxu0 0.0
        %1910 = vmatpush2.msra.mxu0 0.0
        %1911 = vmatprep.subr.mxu0 0.0
        %1912 = vmatpush2.msra.mxu0 0.0
        %1913 = vmatprep.subr.mxu0 0.0
        %1914 = vmatpush2.msra.mxu0 0.0
        %1915 = vmatprep.subr.mxu0 0.0
        %1916 = vmatpush2.msra.mxu0 0.0
        %1917 = vmatprep.subr.mxu0 0.0
        %1918 = vmatpush2.msra.mxu0 0.0
        %1919 = vmatprep.subr.mxu0 0.0
        %1920 = vmatpush2.msra.mxu0 0.0
        %1921 = vmatprep.subr.mxu0 0.0
        %1922 = vmatpush2.msra.mxu0 0.0
        %1923 = vmatprep.subr.mxu0 0.0
        %1924 = vmatpush2.msra.mxu0 0.0
        %1925 = vmatprep.subr.mxu0 0.0
        %1926 = vmatpush2.msra.mxu0 0.0
        %1927 = vmatprep.subr.mxu0 0.0
        %1928 = vmatpush2.msra.mxu0 0.0
        %1929 = vmatprep.subr.mxu0 0.0
        %1930 = vmatpush2.msra.mxu0 0.0
        %1931 = vmatprep.subr.mxu0 0.0
        %1932 = vmatpush2.msra.mxu0 0.0
        %1933 = vmatprep.subr.mxu0 0.0
        %1934 = vmatpush2.msra.mxu0 0.0
        %1935 = vmatprep.subr.mxu0 0.0
        %1936 = vmatpush2.msra.mxu0 0.0
        %1937 = vmatprep.subr.mxu0 0.0
        %1938 = vmatpush2.msra.mxu0 0.0
        %1939 = vmatprep.subr.mxu0 0.0
        %1940 = vmatpush2.msra.mxu0 0.0
        %1941 = vmatprep.mubr.f32.mxu0 0.0
        %1942 = vmatmul.mubr.f32.gmra.mxu0 %v538
        %v1943 = vpop.f32.mrf.mxu0
        %v1944 = vadd.f32 1e-05, %v1943
        %v1945 = vpop.f32.mrf.mxu0
        %1946 = vdwg.mxu0
        %v1947 = vrsqrt.pop %v1944
        %v1948 = vmul.f32 %v1947, %v1789
        %1950 = vset.pattern.permute.xlu0 0
        %1951 = vperm.xlu0 %1950, %v1948
        %v1952 = vpop.permute.xlu0 %1951
        %v1954 = vmul.f32 %v1870, %v1952
        %v1955 = vmul.f32 %v1871, %v1952
        %1957 = vset.pattern.permute.xlu0 0
        %1958 = vperm.xlu0 %1957, %v1791
        %v1959 = vpop.permute.xlu0 %1958
        %v1961 = vadd.f32 %v1954, %v1959
        %v1962 = vadd.f32 %v1955, %v1959
        %v1963 = vadd.f32 %v1961, %v1245
        %v1964 = vadd.f32 %v1962, %v1246
        %v1965 = vmax.f32 %v1963, 0.0
        %v1966 = vmax.f32 %v1964, 0.0
        %s1967 = scalar_lea.vmem %s4, 40
        %v1968 = vld [vmem:[%s1967] sm:$0xff]
        %s1969 = scalar_lea.vmem %s5, 40
        %v1970 = vld [vmem:[%s1969] sm:$0xff]
        %v1971 = vadd.f32 %v1965, %v1966
        %1972 = vadd.xlane.f32.xlu0 %v1971
        %v1973 = vpop.xlane.xlu0 %1972
        %1974 = vmatprep.subr.mxu0 0.0
        %1975 = vmatpush1.msra.mxu0 0.0
        %1976 = vmatprep.subr.mxu0 0.0
        %1977 = vmatpush1.msra.mxu0 0.0
        %1978 = vmatprep.subr.mxu0 0.0
        %1979 = vmatpush1.msra.mxu0 0.0
        %1980 = vmatprep.subr.mxu0 0.0
        %1981 = vmatpush1.msra.mxu0 0.0
        %1982 = vmatprep.subr.mxu0 0.0
        %1983 = vmatpush1.msra.mxu0 0.0
        %1984 = vmatprep.subr.mxu0 0.0
        %1985 = vmatpush1.msra.mxu0 0.0
        %1986 = vmatprep.subr.mxu0 0.0
        %1987 = vmatpush1.msra.mxu0 0.0
        %1988 = vmatprep.subr.mxu0 0.0
        %1989 = vmatpush1.msra.mxu0 0.0
        %1990 = vmatprep.subr.mxu0 0.0
        %1991 = vmatpush1.msra.mxu0 0.0
        %1992 = vmatprep.subr.mxu0 0.0
        %1993 = vmatpush1.msra.mxu0 0.0
        %1994 = vmatprep.subr.mxu0 0.0
        %1995 = vmatpush1.msra.mxu0 0.0
        %1996 = vmatprep.subr.mxu0 0.0
        %1997 = vmatpush1.msra.mxu0 0.0
        %1998 = vmatprep.subr.mxu0 0.0
        %1999 = vmatpush1.msra.mxu0 0.0
        %2000 = vmatprep.subr.mxu0 0.0
        %2001 = vmatpush1.msra.mxu0 0.0
        %2002 = vmatprep.subr.mxu0 0.0
        %2003 = vmatpush1.msra.mxu0 0.0
        %2004 = vmatprep.subr.mxu0 0.0
        %2005 = vmatpush1.msra.mxu0 %v1973
        %2006 = vmatprep.subr.mxu0 0.0
        %2007 = vmatpush2.msra.mxu0 0.0
        %2008 = vmatprep.subr.mxu0 0.0
        %2009 = vmatpush2.msra.mxu0 0.0
        %2010 = vmatprep.subr.mxu0 0.0
        %2011 = vmatpush2.msra.mxu0 0.0
        %2012 = vmatprep.subr.mxu0 0.0
        %2013 = vmatpush2.msra.mxu0 0.0
        %2014 = vmatprep.subr.mxu0 0.0
        %2015 = vmatpush2.msra.mxu0 0.0
        %2016 = vmatprep.subr.mxu0 0.0
        %2017 = vmatpush2.msra.mxu0 0.0
        %2018 = vmatprep.subr.mxu0 0.0
        %2019 = vmatpush2.msra.mxu0 0.0
        %2020 = vmatprep.subr.mxu0 0.0
        %2021 = vmatpush2.msra.mxu0 0.0
        %2022 = vmatprep.subr.mxu0 0.0
        %2023 = vmatpush2.msra.mxu0 0.0
        %2024 = vmatprep.subr.mxu0 0.0
        %2025 = vmatpush2.msra.mxu0 0.0
        %2026 = vmatprep.subr.mxu0 0.0
        %2027 = vmatpush2.msra.mxu0 0.0
        %2028 = vmatprep.subr.mxu0 0.0
        %2029 = vmatpush2.msra.mxu0 0.0
        %2030 = vmatprep.subr.mxu0 0.0
        %2031 = vmatpush2.msra.mxu0 0.0
        %2032 = vmatprep.subr.mxu0 0.0
        %2033 = vmatpush2.msra.mxu0 0.0
        %2034 = vmatprep.subr.mxu0 0.0
        %2035 = vmatpush2.msra.mxu0 0.0
        %2036 = vmatprep.subr.mxu0 0.0
        %2037 = vmatpush2.msra.mxu0 0.0
        %2038 = vmatprep.mubr.f32.mxu0 0.0
        %2039 = vmatmul.mubr.f32.gmra.mxu0 %v538
        %v2040 = vpop.f32.mrf.mxu0
        %v2041 = vadd.f32 0.0, %v2040
        %v2042 = vpop.f32.mrf.mxu0
        %2043 = vdwg.mxu0
        %2045 = vset.pattern.permute.xlu0 0
        %2046 = vperm.xlu0 %2045, %v2041
        %v2047 = vpop.permute.xlu0 %2046
        %v2049 = vsub.f32 %v1965, %v2047
        %v2050 = vsub.f32 %v1966, %v2047
        %v2051 = vmul.f32 %v2049, %v2049
        %v2052 = vmul.f32 %v2050, %v2050
        %v2053 = vadd.f32 %v2051, %v2052
        %2054 = vadd.xlane.f32.xlu0 %v2053
        %v2055 = vpop.xlane.xlu0 %2054
        %2056 = vmatprep.subr.mxu0 0.0
        %2057 = vmatpush1.msra.mxu0 0.0
        %2058 = vmatprep.subr.mxu0 0.0
        %2059 = vmatpush1.msra.mxu0 0.0
        %2060 = vmatprep.subr.mxu0 0.0
        %2061 = vmatpush1.msra.mxu0 0.0
        %2062 = vmatprep.subr.mxu0 0.0
        %2063 = vmatpush1.msra.mxu0 0.0
        %2064 = vmatprep.subr.mxu0 0.0
        %2065 = vmatpush1.msra.mxu0 0.0
        %2066 = vmatprep.subr.mxu0 0.0
        %2067 = vmatpush1.msra.mxu0 0.0
        %2068 = vmatprep.subr.mxu0 0.0
        %2069 = vmatpush1.msra.mxu0 0.0
        %2070 = vmatprep.subr.mxu0 0.0
        %2071 = vmatpush1.msra.mxu0 0.0
        %2072 = vmatprep.subr.mxu0 0.0
        %2073 = vmatpush1.msra.mxu0 0.0
        %2074 = vmatprep.subr.mxu0 0.0
        %2075 = vmatpush1.msra.mxu0 0.0
        %2076 = vmatprep.subr.mxu0 0.0
        %2077 = vmatpush1.msra.mxu0 0.0
        %2078 = vmatprep.subr.mxu0 0.0
        %2079 = vmatpush1.msra.mxu0 0.0
        %2080 = vmatprep.subr.mxu0 0.0
        %2081 = vmatpush1.msra.mxu0 0.0
        %2082 = vmatprep.subr.mxu0 0.0
        %2083 = vmatpush1.msra.mxu0 0.0
        %2084 = vmatprep.subr.mxu0 0.0
        %2085 = vmatpush1.msra.mxu0 0.0
        %2086 = vmatprep.subr.mxu0 0.0
        %2087 = vmatpush1.msra.mxu0 %v2055
        %2088 = vmatprep.subr.mxu0 0.0
        %2089 = vmatpush2.msra.mxu0 0.0
        %2090 = vmatprep.subr.mxu0 0.0
        %2091 = vmatpush2.msra.mxu0 0.0
        %2092 = vmatprep.subr.mxu0 0.0
        %2093 = vmatpush2.msra.mxu0 0.0
        %2094 = vmatprep.subr.mxu0 0.0
        %2095 = vmatpush2.msra.mxu0 0.0
        %2096 = vmatprep.subr.mxu0 0.0
        %2097 = vmatpush2.msra.mxu0 0.0
        %2098 = vmatprep.subr.mxu0 0.0
        %2099 = vmatpush2.msra.mxu0 0.0
        %2100 = vmatprep.subr.mxu0 0.0
        %2101 = vmatpush2.msra.mxu0 0.0
        %2102 = vmatprep.subr.mxu0 0.0
        %2103 = vmatpush2.msra.mxu0 0.0
        %2104 = vmatprep.subr.mxu0 0.0
        %2105 = vmatpush2.msra.mxu0 0.0
        %2106 = vmatprep.subr.mxu0 0.0
        %2107 = vmatpush2.msra.mxu0 0.0
        %2108 = vmatprep.subr.mxu0 0.0
        %2109 = vmatpush2.msra.mxu0 0.0
        %2110 = vmatprep.subr.mxu0 0.0
        %2111 = vmatpush2.msra.mxu0 0.0
        %2112 = vmatprep.subr.mxu0 0.0
        %2113 = vmatpush2.msra.mxu0 0.0
        %2114 = vmatprep.subr.mxu0 0.0
        %2115 = vmatpush2.msra.mxu0 0.0
        %2116 = vmatprep.subr.mxu0 0.0
        %2117 = vmatpush2.msra.mxu0 0.0
        %2118 = vmatprep.subr.mxu0 0.0
        %2119 = vmatpush2.msra.mxu0 0.0
        %2120 = vmatprep.mubr.f32.mxu0 0.0
        %2121 = vmatmul.mubr.f32.gmra.mxu0 %v538
        %v2122 = vpop.f32.mrf.mxu0
        %v2123 = vadd.f32 1e-05, %v2122
        %v2124 = vpop.f32.mrf.mxu0
        %2125 = vdwg.mxu0
        %v2126 = vrsqrt.pop %v2123
        %v2127 = vmul.f32 %v2126, %v1968
        %2129 = vset.pattern.permute.xlu0 0
        %2130 = vperm.xlu0 %2129, %v2127
        %v2131 = vpop.permute.xlu0 %2130
        %v2133 = vmul.f32 %v2049, %v2131
        %v2134 = vmul.f32 %v2050, %v2131
        %2136 = vset.pattern.permute.xlu0 0
        %2137 = vperm.xlu0 %2136, %v1970
        %v2138 = vpop.permute.xlu0 %2137
        %v2140 = vadd.f32 %v2133, %v2138
        %v2141 = vadd.f32 %v2134, %v2138
        %2142 = vst [vmem:[%s286] sm:$0xff] %v2140
        %2143 = vst [vmem:[%s286 + $0x8] sm:$0xff] %v2141
        %s2144 = sand.u32 %s186, 1
        %s2145 = scalar_lea.sflag [#allocation4], %s2144
        %s2146 = sand.u32 %s186, 1
        %s2147 = smul.addr %s2146, 16
        %s2148 = scalar_lea.vmem [#allocation3], %s2147
        // Predicated region
        $region49: #{tpu_custom_call.1} parent=47 // pred_check
          %p2149 = pneg %p196
        $region50: #{tpu_custom_call.1} parent=47 // pred_check_branch
          %2151 = sbr.rel (%p2149) target = $region52
        $region51: #{tpu_custom_call.1} parent=47 // pred_region
          %s2153 = ssub.s32 256, 256
          %2154 = vsyncadd %s2145, %s2153
          %s2155 = smul.addr %s21, 2
          %s2156 = smul.addr %s2155, 128
          %s2157 = scalar_lea.hbm %s7, %s2156
          %s2159 = sshll.u32 %s2148, 4
          %s2160 = int_to_ptr.vmem [resolvable:$true] %s2159
          %2162 = dma.vmem_to_hbm [thread:$0]  %s2160, 256, %s2157, %s2145
        $region52: #{tpu_custom_call.1} parent=47 // pred_fallthru
          _
      $region48: #{tpu_custom_call.1} parent=5 // pred_fallthru
        _
      %p2163 = scmp.le.s32.totalorder 2, %s16
      // Predicated region
      $region53: #{tpu_custom_call.1} parent=5 // pred_check
        %p2164 = pneg %p2163
      $region54: #{tpu_custom_call.1} parent=5 // pred_check_branch
        %2166 = sbr.rel (%p2164) target = $region56
      $region55: #{tpu_custom_call.1} parent=5 // pred_region
        %s2167 = ssub.s32 %s16, 2
        // Predicated region
        $region57: #{tpu_custom_call.1} parent=55 // pred_check
          %p2168 = pneg %p202
        $region58: #{tpu_custom_call.1} parent=55 // pred_check_branch
          %2170 = sbr.rel (%p2168) target = $region60
        $region59: #{tpu_custom_call.1} parent=55 // pred_region
          %s2171 = sand.u32 %s187, 1
          %s2172 = scalar_lea.sflag [#allocation4], %s2171
          %s2173 = sand.u32 %s187, 1
          %s2174 = smul.addr %s2173, 16
          %s2175 = scalar_lea.vmem [#allocation3], %s2174
          %2176 = dma.done %s2172, 256
        $region60: #{tpu_custom_call.1} parent=55 // pred_fallthru
          _
      $region56: #{tpu_custom_call.1} parent=5 // pred_fallthru
        _
    $region6: #{tpu_custom_call.1} parent=1 // loop_footer
      %s20 = sadd.s32 1, %s16
    $region7: #{tpu_custom_call.1} parent=1 // loop_footer_branch
      %15 = sbr.rel target = $region3
    $region8: #{tpu_custom_call.1} parent=1 // loop_exit
      _
    %2177 = vsyncpa [#allocation4], 1
    %s2178 = scalar_lea.sflag [#allocation4], 1
    %2179 = vsyncpa %s2178, 1

</llo_original>
